<compile_context>
chip_gen: v7x
topology: tpu7x:2x2x1
jax: 0.10.0
libtpu: 0.0.40
codegen_flags: <defaults>
</compile_context>

<pallas_src>
import numpy as np
import jax
import jax.numpy as jnp
from jax.experimental import pallas as pl
from jax.experimental.pallas import tpu as pltpu

# ----- hyperparameters (small but consistent with the module's forward) -----
IN_CH = 3
NUM_CLASSES = 10
EMB_DIM = 32
NUM_PATCH_ROW = 2
IMAGE_SIZE = 16
NUM_BLOCKS = 2
HEAD = 4
HIDDEN_DIM = 4 * EMB_DIM
PATCH = IMAGE_SIZE // NUM_PATCH_ROW
NUM_PATCH = NUM_PATCH_ROW ** 2
SEQ = NUM_PATCH + 1
SEQ_PAD = ((SEQ + 7) // 8) * 8        # per-sample row count padded to full sublanes
HEAD_DIM = EMB_DIM // HEAD
SQRT_DH = float(HEAD_DIM) ** 0.5
LN_EPS = 1e-5
OUT_PAD = 128                 # lane-dense padded logits width (real classes = NUM_CLASSES)
MXU_DTYPE = jnp.bfloat16      # native-rate MXU input dtype (accumulate in f32)


# ------------------------------ in-kernel helpers ---------------------------
def _mm(a, b):
    return jnp.dot(a.astype(MXU_DTYPE), b.astype(MXU_DTYPE),
                   preferred_element_type=jnp.float32)


def _layer_norm(x, g, b):
    mean = jnp.mean(x, axis=-1, keepdims=True)
    var = jnp.mean((x - mean) ** 2, axis=-1, keepdims=True)
    return (x - mean) * jax.lax.rsqrt(var + LN_EPS) * g + b


def _erf(x):
    # Abramowitz & Stegun 7.1.26 (|err| < 1.5e-7 ~ f32 eps); avoids relying on
    # lax.erf lowering support inside Mosaic.
    a1, a2, a3, a4, a5 = 0.254829592, -0.284496736, 1.421413741, -1.453152027, 1.061405429
    p = 0.3275911
    s = jnp.where(x >= 0.0, 1.0, -1.0)
    ax = jnp.abs(x)
    t = 1.0 / (1.0 + p * ax)
    poly = ((((a5 * t + a4) * t + a3) * t + a2) * t + a1) * t
    return s * (1.0 - poly * jnp.exp(-ax * ax))


def _gelu_exact(x):
    # matches nn.GELU() (erf form) up to the erf polynomial approximation above
    return 0.5 * x * (1.0 + _erf(x * 0.7071067811865476))


# ------------------------------ fused Pallas kernel --------------------------
def _vit_fused_kernel(patches_ref, add_ref, rowm_ref, headm_ref, cw_ref,
                      ln1g_ref, ln1b_ref, wqkv_ref, wo_ref, bo_ref,
                      ln2g_ref, ln2b_ref, w1_ref, b1_ref, w2_ref, b2_ref,
                      hg_ref, hb_ref, hw_ref, hbias_ref,
                      o_ref):
    BSP = patches_ref.shape[0]           # B * SEQ_PAD
    B = BSP // SEQ_PAD

    # ---- patch embedding + cls token + positional embedding, fully fused:
    #      one matmul plus one additive table (cls / pad rows of `patches` are zero,
    #      the table carries conv_b for patch rows and cls_token+pos[0] for cls rows).
    x = _mm(patches_ref[...], cw_ref[...]) + add_ref[...]            # (BSP, D) f32

    # constants hoisted out of the unrolled block loop
    row_mask = rowm_ref[...]             # (BSP, 1)  1 for real token rows, 0 for padding
    head_mask = headm_ref[...]           # (D, D)    block-diagonal over heads

    # ---- encoder blocks (statically unrolled) ----
    for i in range(NUM_BLOCKS):
        # MHSA branch.  Reference bug kept: softmax output is discarded, so attention is
        # LINEAR and we use associativity  O_h = Q_h (K_h^T V_h).  All heads at once via
        # a head-block-diagonal mask on the (D, D) Gram matrix K^T V — no score tensor,
        # no per-head slicing.  Padded rows are zeroed on the (bias-free) QKV input so
        # they contribute nothing to K^T V.
        h1 = _layer_norm(x, ln1g_ref[i], ln1b_ref[i]) * row_mask
        qkv = _mm(h1, wqkv_ref[i])                                   # (BSP, 3D); Q pre-scaled by 1/sqrt_dh
        outs = []
        for b in range(B):                                           # B is tiny & static
            lo = b * SEQ_PAD
            qb = qkv[lo:lo + SEQ_PAD, 0:EMB_DIM]                     # (SEQ_PAD, D)
            kb = qkv[lo:lo + SEQ_PAD, EMB_DIM:2 * EMB_DIM]
            vb = qkv[lo:lo + SEQ_PAD, 2 * EMB_DIM:3 * EMB_DIM]
            # K^T V: tiny (D, D) contraction over SEQ_PAD rows; kept in f32 (cost is
            # negligible and avoids packed-dtype transpose constraints).
            ktv = jax.lax.dot_general(kb, vb, (((0,), (0,)), ((), ())),
                                      preferred_element_type=jnp.float32)   # (D, D)
            outs.append(_mm(qb, ktv * head_mask))                    # (SEQ_PAD, D)
        attn = jnp.concatenate(outs, axis=0)                         # (BSP, D)
        x = x + _mm(attn, wo_ref[i]) + bo_ref[i]

        # MLP branch (row-local; padded rows are harmless)
        h2 = _layer_norm(x, ln2g_ref[i], ln2b_ref[i])
        m = _gelu_exact(_mm(h2, w1_ref[i]) + b1_ref[i])
        x = x + _mm(m, w2_ref[i]) + b2_ref[i]

    # ---- mlp_head on the full slab (16x128 matmul is cheaper than a strided row
    #      gather); wrapper slices out the cls rows and the real classes.
    hh = _layer_norm(x, hg_ref[...], hb_ref[...])
    o_ref[...] = (_mm(hh, hw_ref[...]) + hbias_ref[...]).astype(o_ref.dtype)


def _vit_fused_call(B, inputs):
    BSP = B * SEQ_PAD

    def full_spec(arr):
        nd = arr.ndim
        return pl.BlockSpec(arr.shape, lambda i, _nd=nd: (0,) * _nd)

    return pl.pallas_call(
        _vit_fused_kernel,
        out_shape=jax.ShapeDtypeStruct((BSP, OUT_PAD), jnp.float32),
        grid=(1,),
        in_specs=[full_spec(a) for a in inputs],
        out_specs=pl.BlockSpec((BSP, OUT_PAD), lambda i: (0, 0)),
        compiler_params=pltpu.CompilerParams(dimension_semantics=("arbitrary",)),
    )(*inputs)


# ------------------------------ parameters ----------------------------------
def init_params(key):
    keys = jax.random.split(key, 64)
    ki = iter(keys)

    def rnd(shape, scale=0.02):
        return scale * jax.random.normal(next(ki), shape, dtype=jnp.float32)

    params = {
        'conv_w': rnd((EMB_DIM, IN_CH, PATCH, PATCH)),   # (out, in, kH, kW) like PyTorch
        'conv_b': rnd((1, EMB_DIM)),
        'cls_token': rnd((1, 1, EMB_DIM)),
        'pos_emb': rnd((1, SEQ, EMB_DIM)),
        'blocks': [],
        'head_ln_g': jnp.ones((1, EMB_DIM), jnp.float32),
        'head_ln_b': jnp.zeros((1, EMB_DIM), jnp.float32),
    }
    for _ in range(NUM_BLOCKS):
        params['blocks'].append(dict(
            ln1_g=jnp.ones((1, EMB_DIM), jnp.float32),
            ln1_b=jnp.zeros((1, EMB_DIM), jnp.float32),
            wq=rnd((EMB_DIM, EMB_DIM)),
            wk=rnd((EMB_DIM, EMB_DIM)),
            wv=rnd((EMB_DIM, EMB_DIM)),
            wo=rnd((EMB_DIM, EMB_DIM)),
            bo=rnd((1, EMB_DIM)),
            ln2_g=jnp.ones((1, EMB_DIM), jnp.float32),
            ln2_b=jnp.zeros((1, EMB_DIM), jnp.float32),
            w1=rnd((EMB_DIM, HIDDEN_DIM)),
            b1=rnd((1, HIDDEN_DIM)),
            w2=rnd((HIDDEN_DIM, EMB_DIM)),
            b2=rnd((1, EMB_DIM)),
        ))
    params['head_w'] = rnd((EMB_DIM, NUM_CLASSES))
    params['head_b'] = rnd((1, NUM_CLASSES))
    return params


# ------------------------------ forward -------------------------------------
def vit_forward(x, params):
    B, C, H, W = x.shape
    nr = H // PATCH
    K = C * PATCH * PATCH
    BSP = B * SEQ_PAD

    # Conv2d(kernel=stride=PATCH) patchify == im2col; kept as tiny XLA glue (pure
    # data relayout — fuses under jit).  Rows laid out batch-major as
    # [cls, patch_0..patch_{NP-1}, pad...] per sample, SEQ_PAD rows per sample.
    xp = x.reshape(B, C, nr, PATCH, nr, PATCH).transpose(0, 2, 4, 1, 3, 5)
    xp = xp.reshape(B, NUM_PATCH, K)
    patches = jnp.zeros((B, SEQ_PAD, K), jnp.float32).at[:, 1:SEQ, :].set(xp)
    patches = patches.reshape(BSP, K)

    cw = params['conv_w'].reshape(EMB_DIM, K).T.astype(MXU_DTYPE)    # (K, D) bf16

    # additive table: cls rows get cls_token + pos[0]; patch rows get conv_b + pos[s];
    # padded rows stay zero.
    pos = params['pos_emb'][0]                                       # (SEQ, D)
    add = jnp.zeros((B, SEQ_PAD, EMB_DIM), jnp.float32)
    add = add.at[:, 0, :].set(params['cls_token'][0, 0] + pos[0])
    add = add.at[:, 1:SEQ, :].set(params['conv_b'] + pos[1:])
    add = add.reshape(BSP, EMB_DIM)

    # per-row validity mask (keeps padded rows out of K^T V) and the
    # head-block-diagonal mask implementing per-head attention on the (D, D) Gram.
    row_id = np.arange(BSP) % SEQ_PAD
    row_mask = jnp.asarray((row_id < SEQ).astype(np.float32))[:, None]          # (BSP, 1)
    hid = np.arange(EMB_DIM) // HEAD_DIM
    head_mask = jnp.asarray((hid[:, None] == hid[None, :]).astype(np.float32))  # (D, D)

    # per-block weights stacked along a leading NUM_BLOCKS axis; QKV fused and the
    # 1/sqrt(head_dim) scale folded into the Q columns; matmul weights pre-cast to bf16.
    blocks = params['blocks']

    def stack(name, dtype=jnp.float32):
        return jnp.stack([blk[name] for blk in blocks], axis=0).astype(dtype)

    inv_sqrt_dh = 1.0 / SQRT_DH
    wqkv = jnp.stack(
        [jnp.concatenate([blk['wq'] * inv_sqrt_dh, blk['wk'], blk['wv']], axis=-1)
         for blk in blocks], axis=0).astype(MXU_DTYPE)
    stacked = [stack('ln1_g'), stack('ln1_b'), wqkv,
               stack('wo', MXU_DTYPE), stack('bo'),
               stack('ln2_g'), stack('ln2_b'),
               stack('w1', MXU_DTYPE), stack('b1'),
               stack('w2', MXU_DTYPE), stack('b2')]

    # lane-dense head: pad logits width 10 -> 128, slice back after the kernel
    head_w = jnp.zeros((EMB_DIM, OUT_PAD), jnp.float32)
    head_w = head_w.at[:, :NUM_CLASSES].set(params['head_w']).astype(MXU_DTYPE)
    head_b = jnp.zeros((1, OUT_PAD), jnp.float32).at[:, :NUM_CLASSES].set(params['head_b'])
    head = [params['head_ln_g'], params['head_ln_b'], head_w, head_b]

    inputs = [patches, add, row_mask, head_mask, cw] + stacked + head
    out = _vit_fused_call(B, inputs)                                 # (BSP, OUT_PAD)
    # cls rows are row 0 of each SEQ_PAD chunk; slice real classes (free XLA glue)
    return out.reshape(B, SEQ_PAD, OUT_PAD)[:, 0, :NUM_CLASSES]


if __name__ == "__main__":
    key = jax.random.PRNGKey(0)
    pkey, xkey = jax.random.split(key)
    params = init_params(pkey)
    x = jax.random.normal(xkey, (2, IN_CH, IMAGE_SIZE, IMAGE_SIZE), dtype=jnp.float32)
    out = jax.jit(vit_forward)(x, params)
    jax.block_until_ready(out)
    assert out.shape == (2, NUM_CLASSES)
    print("KERNEL_OK")
</pallas_src>

<mosaic_0001>
module attributes {stable_mosaic.version = 11 : i64} {
  func.func @_vit_fused_kernel(%arg0: i32, %arg1: memref<16x192xf32, #tpu.memory_space<vmem>>, %arg2: memref<16x32xf32, #tpu.memory_space<vmem>>, %arg3: memref<16x1xf32, #tpu.memory_space<vmem>>, %arg4: memref<32x32xf32, #tpu.memory_space<vmem>>, %arg5: memref<192x32xbf16, #tpu.memory_space<vmem>>, %arg6: memref<2x1x32xf32, #tpu.memory_space<vmem>>, %arg7: memref<2x1x32xf32, #tpu.memory_space<vmem>>, %arg8: memref<2x32x96xbf16, #tpu.memory_space<vmem>>, %arg9: memref<2x32x32xbf16, #tpu.memory_space<vmem>>, %arg10: memref<2x1x32xf32, #tpu.memory_space<vmem>>, %arg11: memref<2x1x32xf32, #tpu.memory_space<vmem>>, %arg12: memref<2x1x32xf32, #tpu.memory_space<vmem>>, %arg13: memref<2x32x128xbf16, #tpu.memory_space<vmem>>, %arg14: memref<2x1x128xf32, #tpu.memory_space<vmem>>, %arg15: memref<2x128x32xbf16, #tpu.memory_space<vmem>>, %arg16: memref<2x1x32xf32, #tpu.memory_space<vmem>>, %arg17: memref<1x32xf32, #tpu.memory_space<vmem>>, %arg18: memref<1x32xf32, #tpu.memory_space<vmem>>, %arg19: memref<32x128xbf16, #tpu.memory_space<vmem>>, %arg20: memref<1x128xf32, #tpu.memory_space<vmem>>, %arg21: memref<16x128xf32, #tpu.memory_space<vmem>>) attributes {dimension_semantics = [#tpu.dimension_semantics<arbitrary>], iteration_bounds = array<i64: 1>, scalar_prefetch = 0 : i64, scratch_operands = 0 : i64, tpu.core_type = #tpu.core_type<tc>, window_params = [{pipeline_mode = #tpu.pipeline_mode<synchronous>, transform_indices = @transform_0, window_bounds = array<i64: 16, 192>}, {pipeline_mode = #tpu.pipeline_mode<synchronous>, transform_indices = @transform_1, window_bounds = array<i64: 16, 32>}, {pipeline_mode = #tpu.pipeline_mode<synchronous>, transform_indices = @transform_2, window_bounds = array<i64: 16, 1>}, {pipeline_mode = #tpu.pipeline_mode<synchronous>, transform_indices = @transform_3, window_bounds = array<i64: 32, 32>}, {pipeline_mode = #tpu.pipeline_mode<synchronous>, transform_indices = @transform_4, window_bounds = array<i64: 192, 32>}, {pipeline_mode = #tpu.pipeline_mode<synchronous>, transform_indices = @transform_5, window_bounds = array<i64: 2, 1, 32>}, {pipeline_mode = #tpu.pipeline_mode<synchronous>, transform_indices = @transform_6, window_bounds = array<i64: 2, 1, 32>}, {pipeline_mode = #tpu.pipeline_mode<synchronous>, transform_indices = @transform_7, window_bounds = array<i64: 2, 32, 96>}, {pipeline_mode = #tpu.pipeline_mode<synchronous>, transform_indices = @transform_8, window_bounds = array<i64: 2, 32, 32>}, {pipeline_mode = #tpu.pipeline_mode<synchronous>, transform_indices = @transform_9, window_bounds = array<i64: 2, 1, 32>}, {pipeline_mode = #tpu.pipeline_mode<synchronous>, transform_indices = @transform_10, window_bounds = array<i64: 2, 1, 32>}, {pipeline_mode = #tpu.pipeline_mode<synchronous>, transform_indices = @transform_11, window_bounds = array<i64: 2, 1, 32>}, {pipeline_mode = #tpu.pipeline_mode<synchronous>, transform_indices = @transform_12, window_bounds = array<i64: 2, 32, 128>}, {pipeline_mode = #tpu.pipeline_mode<synchronous>, transform_indices = @transform_13, window_bounds = array<i64: 2, 1, 128>}, {pipeline_mode = #tpu.pipeline_mode<synchronous>, transform_indices = @transform_14, window_bounds = array<i64: 2, 128, 32>}, {pipeline_mode = #tpu.pipeline_mode<synchronous>, transform_indices = @transform_15, window_bounds = array<i64: 2, 1, 32>}, {pipeline_mode = #tpu.pipeline_mode<synchronous>, transform_indices = @transform_16, window_bounds = array<i64: 1, 32>}, {pipeline_mode = #tpu.pipeline_mode<synchronous>, transform_indices = @transform_17, window_bounds = array<i64: 1, 32>}, {pipeline_mode = #tpu.pipeline_mode<synchronous>, transform_indices = @transform_18, window_bounds = array<i64: 32, 128>}, {pipeline_mode = #tpu.pipeline_mode<synchronous>, transform_indices = @transform_19, window_bounds = array<i64: 1, 128>}, {pipeline_mode = #tpu.pipeline_mode<synchronous>, transform_indices = @transform_20, window_bounds = array<i64: 16, 128>}]} {
    %c0 = arith.constant 0 : index
    %c0_0 = arith.constant 0 : index
    %0 = vector.load %arg1[%c0, %c0_0] : memref<16x192xf32, #tpu.memory_space<vmem>>, vector<16x192xf32>
    %c0_1 = arith.constant 0 : index
    %c0_2 = arith.constant 0 : index
    %1 = vector.load %arg5[%c0_1, %c0_2] : memref<192x32xbf16, #tpu.memory_space<vmem>>, vector<192x32xbf16>
    %2 = arith.truncf %0 : vector<16x192xf32> to vector<16x192xbf16>
    %cst = arith.constant dense<0.000000e+00> : vector<16x32xf32>
    %3 = tpu.matmul %2, %1, %cst {dimension_numbers = #tpu.dot_dimension_numbers<[1], [0], [0], [1], [0, 0, 1, 1], [], []>} : vector<16x192xbf16>, vector<192x32xbf16>, vector<16x32xf32> -> vector<16x32xf32>
    %c0_3 = arith.constant 0 : index
    %c0_4 = arith.constant 0 : index
    %4 = vector.load %arg2[%c0_3, %c0_4] : memref<16x32xf32, #tpu.memory_space<vmem>>, vector<16x32xf32>
    %5 = arith.addf %3, %4 : vector<16x32xf32>
    %c0_5 = arith.constant 0 : index
    %c0_6 = arith.constant 0 : index
    %6 = vector.load %arg3[%c0_5, %c0_6] : memref<16x1xf32, #tpu.memory_space<vmem>>, vector<16x1xf32>
    %c0_7 = arith.constant 0 : index
    %c0_8 = arith.constant 0 : index
    %7 = vector.load %arg4[%c0_7, %c0_8] : memref<32x32xf32, #tpu.memory_space<vmem>>, vector<32x32xf32>
    %c0_9 = arith.constant 0 : index
    %c0_10 = arith.constant 0 : index
    %c0_11 = arith.constant 0 : index
    %8 = vector.load %arg6[%c0_9, %c0_10, %c0_11] : memref<2x1x32xf32, #tpu.memory_space<vmem>>, vector<1x1x32xf32>
    %9 = vector.shape_cast %8 : vector<1x1x32xf32> to vector<1x32xf32>
    %c0_12 = arith.constant 0 : index
    %c0_13 = arith.constant 0 : index
    %c0_14 = arith.constant 0 : index
    %10 = vector.load %arg7[%c0_12, %c0_13, %c0_14] : memref<2x1x32xf32, #tpu.memory_space<vmem>>, vector<1x1x32xf32>
    %11 = vector.shape_cast %10 : vector<1x1x32xf32> to vector<1x32xf32>
    %cst_15 = arith.constant dense<0.000000e+00> : vector<16xf32>
    %12 = vector.multi_reduction <add>, %5, %cst_15 [1] : vector<16x32xf32> to vector<16xf32>
    %13 = vector.shape_cast %12 : vector<16xf32> to vector<16x1xf32>
    %cst_16 = arith.constant 3.200000e+01 : f32
    %14 = vector.broadcast %cst_16 : f32 to vector<16x1xf32>
    %15 = arith.divf %13, %14 : vector<16x1xf32>
    %16 = vector.broadcast %15 : vector<16x1xf32> to vector<16x32xf32>
    %17 = arith.subf %5, %16 : vector<16x32xf32>
    %18 = arith.mulf %17, %17 : vector<16x32xf32>
    %cst_17 = arith.constant dense<0.000000e+00> : vector<16xf32>
    %19 = vector.multi_reduction <add>, %18, %cst_17 [1] : vector<16x32xf32> to vector<16xf32>
    %20 = vector.shape_cast %19 : vector<16xf32> to vector<16x1xf32>
    %cst_18 = arith.constant 3.200000e+01 : f32
    %21 = vector.broadcast %cst_18 : f32 to vector<16x1xf32>
    %22 = arith.divf %20, %21 : vector<16x1xf32>
    %23 = vector.broadcast %15 : vector<16x1xf32> to vector<16x32xf32>
    %24 = arith.subf %5, %23 : vector<16x32xf32>
    %cst_19 = arith.constant 9.99999974E-6 : f32
    %25 = vector.broadcast %cst_19 : f32 to vector<16x1xf32>
    %26 = arith.addf %22, %25 : vector<16x1xf32>
    %27 = math.rsqrt %26 : vector<16x1xf32>
    %28 = vector.broadcast %27 : vector<16x1xf32> to vector<16x32xf32>
    %29 = arith.mulf %24, %28 : vector<16x32xf32>
    %30 = vector.broadcast %9 : vector<1x32xf32> to vector<16x32xf32>
    %31 = arith.mulf %29, %30 : vector<16x32xf32>
    %32 = vector.broadcast %11 : vector<1x32xf32> to vector<16x32xf32>
    %33 = arith.addf %31, %32 : vector<16x32xf32>
    %34 = vector.broadcast %6 : vector<16x1xf32> to vector<16x32xf32>
    %35 = arith.mulf %33, %34 : vector<16x32xf32>
    %c0_20 = arith.constant 0 : index
    %c0_21 = arith.constant 0 : index
    %c0_22 = arith.constant 0 : index
    %36 = vector.load %arg8[%c0_20, %c0_21, %c0_22] : memref<2x32x96xbf16, #tpu.memory_space<vmem>>, vector<1x32x96xbf16>
    %37 = vector.shape_cast %36 : vector<1x32x96xbf16> to vector<32x96xbf16>
    %38 = arith.truncf %35 : vector<16x32xf32> to vector<16x32xbf16>
    %cst_23 = arith.constant dense<0.000000e+00> : vector<16x96xf32>
    %39 = tpu.matmul %38, %37, %cst_23 {dimension_numbers = #tpu.dot_dimension_numbers<[1], [0], [0], [1], [0, 0, 1, 1], [], []>} : vector<16x32xbf16>, vector<32x96xbf16>, vector<16x96xf32> -> vector<16x96xf32>
    %40 = vector.extract_strided_slice %39 {offsets = [0, 0], sizes = [8, 32], strides = [1, 1]} : vector<16x96xf32> to vector<8x32xf32>
    %41 = vector.extract_strided_slice %39 {offsets = [0, 32], sizes = [8, 32], strides = [1, 1]} : vector<16x96xf32> to vector<8x32xf32>
    %42 = vector.extract_strided_slice %39 {offsets = [0, 64], sizes = [8, 32], strides = [1, 1]} : vector<16x96xf32> to vector<8x32xf32>
    %cst_24 = arith.constant dense<0.000000e+00> : vector<32x32xf32>
    %43 = tpu.matmul %41, %42, %cst_24 {dimension_numbers = #tpu.dot_dimension_numbers<[0], [0], [1], [1], [0, 1, 1, 1], [], []>} : vector<8x32xf32>, vector<8x32xf32>, vector<32x32xf32> -> vector<32x32xf32>
    %44 = arith.mulf %43, %7 : vector<32x32xf32>
    %45 = arith.truncf %40 : vector<8x32xf32> to vector<8x32xbf16>
    %46 = arith.truncf %44 : vector<32x32xf32> to vector<32x32xbf16>
    %cst_25 = arith.constant dense<0.000000e+00> : vector<8x32xf32>
    %47 = tpu.matmul %45, %46, %cst_25 {dimension_numbers = #tpu.dot_dimension_numbers<[1], [0], [0], [1], [0, 0, 1, 1], [], []>} : vector<8x32xbf16>, vector<32x32xbf16>, vector<8x32xf32> -> vector<8x32xf32>
    %48 = vector.extract_strided_slice %39 {offsets = [8, 0], sizes = [8, 32], strides = [1, 1]} : vector<16x96xf32> to vector<8x32xf32>
    %49 = vector.extract_strided_slice %39 {offsets = [8, 32], sizes = [8, 32], strides = [1, 1]} : vector<16x96xf32> to vector<8x32xf32>
    %50 = vector.extract_strided_slice %39 {offsets = [8, 64], sizes = [8, 32], strides = [1, 1]} : vector<16x96xf32> to vector<8x32xf32>
    %cst_26 = arith.constant dense<0.000000e+00> : vector<32x32xf32>
    %51 = tpu.matmul %49, %50, %cst_26 {dimension_numbers = #tpu.dot_dimension_numbers<[0], [0], [1], [1], [0, 1, 1, 1], [], []>} : vector<8x32xf32>, vector<8x32xf32>, vector<32x32xf32> -> vector<32x32xf32>
    %52 = arith.mulf %51, %7 : vector<32x32xf32>
    %53 = arith.truncf %48 : vector<8x32xf32> to vector<8x32xbf16>
    %54 = arith.truncf %52 : vector<32x32xf32> to vector<32x32xbf16>
    %cst_27 = arith.constant dense<0.000000e+00> : vector<8x32xf32>
    %55 = tpu.matmul %53, %54, %cst_27 {dimension_numbers = #tpu.dot_dimension_numbers<[1], [0], [0], [1], [0, 0, 1, 1], [], []>} : vector<8x32xbf16>, vector<32x32xbf16>, vector<8x32xf32> -> vector<8x32xf32>
    %56 = tpu.concatenate %47, %55 in 0 : vector<8x32xf32>, vector<8x32xf32> -> vector<16x32xf32>
    %c0_28 = arith.constant 0 : index
    %c0_29 = arith.constant 0 : index
    %c0_30 = arith.constant 0 : index
    %57 = vector.load %arg9[%c0_28, %c0_29, %c0_30] : memref<2x32x32xbf16, #tpu.memory_space<vmem>>, vector<1x32x32xbf16>
    %58 = vector.shape_cast %57 : vector<1x32x32xbf16> to vector<32x32xbf16>
    %59 = arith.truncf %56 : vector<16x32xf32> to vector<16x32xbf16>
    %cst_31 = arith.constant dense<0.000000e+00> : vector<16x32xf32>
    %60 = tpu.matmul %59, %58, %cst_31 {dimension_numbers = #tpu.dot_dimension_numbers<[1], [0], [0], [1], [0, 0, 1, 1], [], []>} : vector<16x32xbf16>, vector<32x32xbf16>, vector<16x32xf32> -> vector<16x32xf32>
    %61 = arith.addf %5, %60 : vector<16x32xf32>
    %c0_32 = arith.constant 0 : index
    %c0_33 = arith.constant 0 : index
    %c0_34 = arith.constant 0 : index
    %62 = vector.load %arg10[%c0_32, %c0_33, %c0_34] : memref<2x1x32xf32, #tpu.memory_space<vmem>>, vector<1x1x32xf32>
    %63 = vector.shape_cast %62 : vector<1x1x32xf32> to vector<1x32xf32>
    %64 = vector.broadcast %63 : vector<1x32xf32> to vector<16x32xf32>
    %65 = arith.addf %61, %64 : vector<16x32xf32>
    %c0_35 = arith.constant 0 : index
    %c0_36 = arith.constant 0 : index
    %c0_37 = arith.constant 0 : index
    %66 = vector.load %arg11[%c0_35, %c0_36, %c0_37] : memref<2x1x32xf32, #tpu.memory_space<vmem>>, vector<1x1x32xf32>
    %67 = vector.shape_cast %66 : vector<1x1x32xf32> to vector<1x32xf32>
    %c0_38 = arith.constant 0 : index
    %c0_39 = arith.constant 0 : index
    %c0_40 = arith.constant 0 : index
    %68 = vector.load %arg12[%c0_38, %c0_39, %c0_40] : memref<2x1x32xf32, #tpu.memory_space<vmem>>, vector<1x1x32xf32>
    %69 = vector.shape_cast %68 : vector<1x1x32xf32> to vector<1x32xf32>
    %cst_41 = arith.constant dense<0.000000e+00> : vector<16xf32>
    %70 = vector.multi_reduction <add>, %65, %cst_41 [1] : vector<16x32xf32> to vector<16xf32>
    %71 = vector.shape_cast %70 : vector<16xf32> to vector<16x1xf32>
    %cst_42 = arith.constant 3.200000e+01 : f32
    %72 = vector.broadcast %cst_42 : f32 to vector<16x1xf32>
    %73 = arith.divf %71, %72 : vector<16x1xf32>
    %74 = vector.broadcast %73 : vector<16x1xf32> to vector<16x32xf32>
    %75 = arith.subf %65, %74 : vector<16x32xf32>
    %76 = arith.mulf %75, %75 : vector<16x32xf32>
    %cst_43 = arith.constant dense<0.000000e+00> : vector<16xf32>
    %77 = vector.multi_reduction <add>, %76, %cst_43 [1] : vector<16x32xf32> to vector<16xf32>
    %78 = vector.shape_cast %77 : vector<16xf32> to vector<16x1xf32>
    %cst_44 = arith.constant 3.200000e+01 : f32
    %79 = vector.broadcast %cst_44 : f32 to vector<16x1xf32>
    %80 = arith.divf %78, %79 : vector<16x1xf32>
    %81 = vector.broadcast %73 : vector<16x1xf32> to vector<16x32xf32>
    %82 = arith.subf %65, %81 : vector<16x32xf32>
    %cst_45 = arith.constant 9.99999974E-6 : f32
    %83 = vector.broadcast %cst_45 : f32 to vector<16x1xf32>
    %84 = arith.addf %80, %83 : vector<16x1xf32>
    %85 = math.rsqrt %84 : vector<16x1xf32>
    %86 = vector.broadcast %85 : vector<16x1xf32> to vector<16x32xf32>
    %87 = arith.mulf %82, %86 : vector<16x32xf32>
    %88 = vector.broadcast %67 : vector<1x32xf32> to vector<16x32xf32>
    %89 = arith.mulf %87, %88 : vector<16x32xf32>
    %90 = vector.broadcast %69 : vector<1x32xf32> to vector<16x32xf32>
    %91 = arith.addf %89, %90 : vector<16x32xf32>
    %c0_46 = arith.constant 0 : index
    %c0_47 = arith.constant 0 : index
    %c0_48 = arith.constant 0 : index
    %92 = vector.load %arg13[%c0_46, %c0_47, %c0_48] : memref<2x32x128xbf16, #tpu.memory_space<vmem>>, vector<1x32x128xbf16>
    %93 = vector.shape_cast %92 : vector<1x32x128xbf16> to vector<32x128xbf16>
    %94 = arith.truncf %91 : vector<16x32xf32> to vector<16x32xbf16>
    %cst_49 = arith.constant dense<0.000000e+00> : vector<16x128xf32>
    %95 = tpu.matmul %94, %93, %cst_49 {dimension_numbers = #tpu.dot_dimension_numbers<[1], [0], [0], [1], [0, 0, 1, 1], [], []>} : vector<16x32xbf16>, vector<32x128xbf16>, vector<16x128xf32> -> vector<16x128xf32>
    %c0_50 = arith.constant 0 : index
    %c0_51 = arith.constant 0 : index
    %c0_52 = arith.constant 0 : index
    %96 = vector.load %arg14[%c0_50, %c0_51, %c0_52] : memref<2x1x128xf32, #tpu.memory_space<vmem>>, vector<1x1x128xf32>
    %97 = vector.shape_cast %96 : vector<1x1x128xf32> to vector<1x128xf32>
    %98 = vector.broadcast %97 : vector<1x128xf32> to vector<16x128xf32>
    %99 = arith.addf %95, %98 : vector<16x128xf32>
    %cst_53 = arith.constant 5.000000e-01 : f32
    %100 = vector.broadcast %cst_53 : f32 to vector<16x128xf32>
    %101 = arith.mulf %100, %99 : vector<16x128xf32>
    %cst_54 = arith.constant 0.707106769 : f32
    %102 = vector.broadcast %cst_54 : f32 to vector<16x128xf32>
    %103 = arith.mulf %99, %102 : vector<16x128xf32>
    %cst_55 = arith.constant 0.000000e+00 : f32
    %104 = vector.broadcast %cst_55 : f32 to vector<16x128xf32>
    %105 = arith.cmpf oge, %103, %104 : vector<16x128xf32>
    %cst_56 = arith.constant 1.000000e+00 : f32
    %cst_57 = arith.constant -1.000000e+00 : f32
    %106 = vector.broadcast %cst_56 : f32 to vector<16x128xf32>
    %107 = vector.broadcast %cst_57 : f32 to vector<16x128xf32>
    %108 = arith.select %105, %106, %107 : vector<16x128xi1>, vector<16x128xf32>
    %109 = math.absf %103 : vector<16x128xf32>
    %cst_58 = arith.constant 0.327591091 : f32
    %110 = vector.broadcast %cst_58 : f32 to vector<16x128xf32>
    %111 = arith.mulf %110, %109 : vector<16x128xf32>
    %cst_59 = arith.constant 1.000000e+00 : f32
    %112 = vector.broadcast %cst_59 : f32 to vector<16x128xf32>
    %113 = arith.addf %112, %111 : vector<16x128xf32>
    %cst_60 = arith.constant 1.000000e+00 : f32
    %114 = vector.broadcast %cst_60 : f32 to vector<16x128xf32>
    %115 = arith.divf %114, %113 : vector<16x128xf32>
    %cst_61 = arith.constant 1.06140542 : f32
    %116 = vector.broadcast %cst_61 : f32 to vector<16x128xf32>
    %117 = arith.mulf %116, %115 : vector<16x128xf32>
    %cst_62 = arith.constant -1.45315206 : f32
    %118 = vector.broadcast %cst_62 : f32 to vector<16x128xf32>
    %119 = arith.addf %117, %118 : vector<16x128xf32>
    %120 = arith.mulf %119, %115 : vector<16x128xf32>
    %cst_63 = arith.constant 1.42141378 : f32
    %121 = vector.broadcast %cst_63 : f32 to vector<16x128xf32>
    %122 = arith.addf %120, %121 : vector<16x128xf32>
    %123 = arith.mulf %122, %115 : vector<16x128xf32>
    %cst_64 = arith.constant -0.284496725 : f32
    %124 = vector.broadcast %cst_64 : f32 to vector<16x128xf32>
    %125 = arith.addf %123, %124 : vector<16x128xf32>
    %126 = arith.mulf %125, %115 : vector<16x128xf32>
    %cst_65 = arith.constant 0.254829586 : f32
    %127 = vector.broadcast %cst_65 : f32 to vector<16x128xf32>
    %128 = arith.addf %126, %127 : vector<16x128xf32>
    %129 = arith.mulf %128, %115 : vector<16x128xf32>
    %cst_66 = arith.constant 0.000000e+00 : f32
    %130 = vector.broadcast %cst_66 : f32 to vector<16x128xf32>
    %131 = arith.subf %130, %109 : vector<16x128xf32>
    %132 = arith.mulf %131, %109 : vector<16x128xf32>
    %133 = math.exp %132 : vector<16x128xf32>
    %134 = arith.mulf %129, %133 : vector<16x128xf32>
    %cst_67 = arith.constant 1.000000e+00 : f32
    %135 = vector.broadcast %cst_67 : f32 to vector<16x128xf32>
    %136 = arith.subf %135, %134 : vector<16x128xf32>
    %137 = arith.mulf %108, %136 : vector<16x128xf32>
    %cst_68 = arith.constant 1.000000e+00 : f32
    %138 = vector.broadcast %cst_68 : f32 to vector<16x128xf32>
    %139 = arith.addf %138, %137 : vector<16x128xf32>
    %140 = arith.mulf %101, %139 : vector<16x128xf32>
    %c0_69 = arith.constant 0 : index
    %c0_70 = arith.constant 0 : index
    %c0_71 = arith.constant 0 : index
    %141 = vector.load %arg15[%c0_69, %c0_70, %c0_71] : memref<2x128x32xbf16, #tpu.memory_space<vmem>>, vector<1x128x32xbf16>
    %142 = vector.shape_cast %141 : vector<1x128x32xbf16> to vector<128x32xbf16>
    %143 = arith.truncf %140 : vector<16x128xf32> to vector<16x128xbf16>
    %cst_72 = arith.constant dense<0.000000e+00> : vector<16x32xf32>
    %144 = tpu.matmul %143, %142, %cst_72 {dimension_numbers = #tpu.dot_dimension_numbers<[1], [0], [0], [1], [0, 0, 1, 1], [], []>} : vector<16x128xbf16>, vector<128x32xbf16>, vector<16x32xf32> -> vector<16x32xf32>
    %145 = arith.addf %65, %144 : vector<16x32xf32>
    %c0_73 = arith.constant 0 : index
    %c0_74 = arith.constant 0 : index
    %c0_75 = arith.constant 0 : index
    %146 = vector.load %arg16[%c0_73, %c0_74, %c0_75] : memref<2x1x32xf32, #tpu.memory_space<vmem>>, vector<1x1x32xf32>
    %147 = vector.shape_cast %146 : vector<1x1x32xf32> to vector<1x32xf32>
    %148 = vector.broadcast %147 : vector<1x32xf32> to vector<16x32xf32>
    %149 = arith.addf %145, %148 : vector<16x32xf32>
    %c1 = arith.constant 1 : index
    %c0_76 = arith.constant 0 : index
    %c0_77 = arith.constant 0 : index
    %150 = vector.load %arg6[%c1, %c0_76, %c0_77] : memref<2x1x32xf32, #tpu.memory_space<vmem>>, vector<1x1x32xf32>
    %151 = vector.shape_cast %150 : vector<1x1x32xf32> to vector<1x32xf32>
    %c1_78 = arith.constant 1 : index
    %c0_79 = arith.constant 0 : index
    %c0_80 = arith.constant 0 : index
    %152 = vector.load %arg7[%c1_78, %c0_79, %c0_80] : memref<2x1x32xf32, #tpu.memory_space<vmem>>, vector<1x1x32xf32>
    %153 = vector.shape_cast %152 : vector<1x1x32xf32> to vector<1x32xf32>
    %cst_81 = arith.constant dense<0.000000e+00> : vector<16xf32>
    %154 = vector.multi_reduction <add>, %149, %cst_81 [1] : vector<16x32xf32> to vector<16xf32>
    %155 = vector.shape_cast %154 : vector<16xf32> to vector<16x1xf32>
    %cst_82 = arith.constant 3.200000e+01 : f32
    %156 = vector.broadcast %cst_82 : f32 to vector<16x1xf32>
    %157 = arith.divf %155, %156 : vector<16x1xf32>
    %158 = vector.broadcast %157 : vector<16x1xf32> to vector<16x32xf32>
    %159 = arith.subf %149, %158 : vector<16x32xf32>
    %160 = arith.mulf %159, %159 : vector<16x32xf32>
    %cst_83 = arith.constant dense<0.000000e+00> : vector<16xf32>
    %161 = vector.multi_reduction <add>, %160, %cst_83 [1] : vector<16x32xf32> to vector<16xf32>
    %162 = vector.shape_cast %161 : vector<16xf32> to vector<16x1xf32>
    %cst_84 = arith.constant 3.200000e+01 : f32
    %163 = vector.broadcast %cst_84 : f32 to vector<16x1xf32>
    %164 = arith.divf %162, %163 : vector<16x1xf32>
    %165 = vector.broadcast %157 : vector<16x1xf32> to vector<16x32xf32>
    %166 = arith.subf %149, %165 : vector<16x32xf32>
    %cst_85 = arith.constant 9.99999974E-6 : f32
    %167 = vector.broadcast %cst_85 : f32 to vector<16x1xf32>
    %168 = arith.addf %164, %167 : vector<16x1xf32>
    %169 = math.rsqrt %168 : vector<16x1xf32>
    %170 = vector.broadcast %169 : vector<16x1xf32> to vector<16x32xf32>
    %171 = arith.mulf %166, %170 : vector<16x32xf32>
    %172 = vector.broadcast %151 : vector<1x32xf32> to vector<16x32xf32>
    %173 = arith.mulf %171, %172 : vector<16x32xf32>
    %174 = vector.broadcast %153 : vector<1x32xf32> to vector<16x32xf32>
    %175 = arith.addf %173, %174 : vector<16x32xf32>
    %176 = vector.broadcast %6 : vector<16x1xf32> to vector<16x32xf32>
    %177 = arith.mulf %175, %176 : vector<16x32xf32>
    %c1_86 = arith.constant 1 : index
    %c0_87 = arith.constant 0 : index
    %c0_88 = arith.constant 0 : index
    %178 = vector.load %arg8[%c1_86, %c0_87, %c0_88] : memref<2x32x96xbf16, #tpu.memory_space<vmem>>, vector<1x32x96xbf16>
    %179 = vector.shape_cast %178 : vector<1x32x96xbf16> to vector<32x96xbf16>
    %180 = arith.truncf %177 : vector<16x32xf32> to vector<16x32xbf16>
    %cst_89 = arith.constant dense<0.000000e+00> : vector<16x96xf32>
    %181 = tpu.matmul %180, %179, %cst_89 {dimension_numbers = #tpu.dot_dimension_numbers<[1], [0], [0], [1], [0, 0, 1, 1], [], []>} : vector<16x32xbf16>, vector<32x96xbf16>, vector<16x96xf32> -> vector<16x96xf32>
    %182 = vector.extract_strided_slice %181 {offsets = [0, 0], sizes = [8, 32], strides = [1, 1]} : vector<16x96xf32> to vector<8x32xf32>
    %183 = vector.extract_strided_slice %181 {offsets = [0, 32], sizes = [8, 32], strides = [1, 1]} : vector<16x96xf32> to vector<8x32xf32>
    %184 = vector.extract_strided_slice %181 {offsets = [0, 64], sizes = [8, 32], strides = [1, 1]} : vector<16x96xf32> to vector<8x32xf32>
    %cst_90 = arith.constant dense<0.000000e+00> : vector<32x32xf32>
    %185 = tpu.matmul %183, %184, %cst_90 {dimension_numbers = #tpu.dot_dimension_numbers<[0], [0], [1], [1], [0, 1, 1, 1], [], []>} : vector<8x32xf32>, vector<8x32xf32>, vector<32x32xf32> -> vector<32x32xf32>
    %186 = arith.mulf %185, %7 : vector<32x32xf32>
    %187 = arith.truncf %182 : vector<8x32xf32> to vector<8x32xbf16>
    %188 = arith.truncf %186 : vector<32x32xf32> to vector<32x32xbf16>
    %cst_91 = arith.constant dense<0.000000e+00> : vector<8x32xf32>
    %189 = tpu.matmul %187, %188, %cst_91 {dimension_numbers = #tpu.dot_dimension_numbers<[1], [0], [0], [1], [0, 0, 1, 1], [], []>} : vector<8x32xbf16>, vector<32x32xbf16>, vector<8x32xf32> -> vector<8x32xf32>
    %190 = vector.extract_strided_slice %181 {offsets = [8, 0], sizes = [8, 32], strides = [1, 1]} : vector<16x96xf32> to vector<8x32xf32>
    %191 = vector.extract_strided_slice %181 {offsets = [8, 32], sizes = [8, 32], strides = [1, 1]} : vector<16x96xf32> to vector<8x32xf32>
    %192 = vector.extract_strided_slice %181 {offsets = [8, 64], sizes = [8, 32], strides = [1, 1]} : vector<16x96xf32> to vector<8x32xf32>
    %cst_92 = arith.constant dense<0.000000e+00> : vector<32x32xf32>
    %193 = tpu.matmul %191, %192, %cst_92 {dimension_numbers = #tpu.dot_dimension_numbers<[0], [0], [1], [1], [0, 1, 1, 1], [], []>} : vector<8x32xf32>, vector<8x32xf32>, vector<32x32xf32> -> vector<32x32xf32>
    %194 = arith.mulf %193, %7 : vector<32x32xf32>
    %195 = arith.truncf %190 : vector<8x32xf32> to vector<8x32xbf16>
    %196 = arith.truncf %194 : vector<32x32xf32> to vector<32x32xbf16>
    %cst_93 = arith.constant dense<0.000000e+00> : vector<8x32xf32>
    %197 = tpu.matmul %195, %196, %cst_93 {dimension_numbers = #tpu.dot_dimension_numbers<[1], [0], [0], [1], [0, 0, 1, 1], [], []>} : vector<8x32xbf16>, vector<32x32xbf16>, vector<8x32xf32> -> vector<8x32xf32>
    %198 = tpu.concatenate %189, %197 in 0 : vector<8x32xf32>, vector<8x32xf32> -> vector<16x32xf32>
    %c1_94 = arith.constant 1 : index
    %c0_95 = arith.constant 0 : index
    %c0_96 = arith.constant 0 : index
    %199 = vector.load %arg9[%c1_94, %c0_95, %c0_96] : memref<2x32x32xbf16, #tpu.memory_space<vmem>>, vector<1x32x32xbf16>
    %200 = vector.shape_cast %199 : vector<1x32x32xbf16> to vector<32x32xbf16>
    %201 = arith.truncf %198 : vector<16x32xf32> to vector<16x32xbf16>
    %cst_97 = arith.constant dense<0.000000e+00> : vector<16x32xf32>
    %202 = tpu.matmul %201, %200, %cst_97 {dimension_numbers = #tpu.dot_dimension_numbers<[1], [0], [0], [1], [0, 0, 1, 1], [], []>} : vector<16x32xbf16>, vector<32x32xbf16>, vector<16x32xf32> -> vector<16x32xf32>
    %203 = arith.addf %149, %202 : vector<16x32xf32>
    %c1_98 = arith.constant 1 : index
    %c0_99 = arith.constant 0 : index
    %c0_100 = arith.constant 0 : index
    %204 = vector.load %arg10[%c1_98, %c0_99, %c0_100] : memref<2x1x32xf32, #tpu.memory_space<vmem>>, vector<1x1x32xf32>
    %205 = vector.shape_cast %204 : vector<1x1x32xf32> to vector<1x32xf32>
    %206 = vector.broadcast %205 : vector<1x32xf32> to vector<16x32xf32>
    %207 = arith.addf %203, %206 : vector<16x32xf32>
    %c1_101 = arith.constant 1 : index
    %c0_102 = arith.constant 0 : index
    %c0_103 = arith.constant 0 : index
    %208 = vector.load %arg11[%c1_101, %c0_102, %c0_103] : memref<2x1x32xf32, #tpu.memory_space<vmem>>, vector<1x1x32xf32>
    %209 = vector.shape_cast %208 : vector<1x1x32xf32> to vector<1x32xf32>
    %c1_104 = arith.constant 1 : index
    %c0_105 = arith.constant 0 : index
    %c0_106 = arith.constant 0 : index
    %210 = vector.load %arg12[%c1_104, %c0_105, %c0_106] : memref<2x1x32xf32, #tpu.memory_space<vmem>>, vector<1x1x32xf32>
    %211 = vector.shape_cast %210 : vector<1x1x32xf32> to vector<1x32xf32>
    %cst_107 = arith.constant dense<0.000000e+00> : vector<16xf32>
    %212 = vector.multi_reduction <add>, %207, %cst_107 [1] : vector<16x32xf32> to vector<16xf32>
    %213 = vector.shape_cast %212 : vector<16xf32> to vector<16x1xf32>
    %cst_108 = arith.constant 3.200000e+01 : f32
    %214 = vector.broadcast %cst_108 : f32 to vector<16x1xf32>
    %215 = arith.divf %213, %214 : vector<16x1xf32>
    %216 = vector.broadcast %215 : vector<16x1xf32> to vector<16x32xf32>
    %217 = arith.subf %207, %216 : vector<16x32xf32>
    %218 = arith.mulf %217, %217 : vector<16x32xf32>
    %cst_109 = arith.constant dense<0.000000e+00> : vector<16xf32>
    %219 = vector.multi_reduction <add>, %218, %cst_109 [1] : vector<16x32xf32> to vector<16xf32>
    %220 = vector.shape_cast %219 : vector<16xf32> to vector<16x1xf32>
    %cst_110 = arith.constant 3.200000e+01 : f32
    %221 = vector.broadcast %cst_110 : f32 to vector<16x1xf32>
    %222 = arith.divf %220, %221 : vector<16x1xf32>
    %223 = vector.broadcast %215 : vector<16x1xf32> to vector<16x32xf32>
    %224 = arith.subf %207, %223 : vector<16x32xf32>
    %cst_111 = arith.constant 9.99999974E-6 : f32
    %225 = vector.broadcast %cst_111 : f32 to vector<16x1xf32>
    %226 = arith.addf %222, %225 : vector<16x1xf32>
    %227 = math.rsqrt %226 : vector<16x1xf32>
    %228 = vector.broadcast %227 : vector<16x1xf32> to vector<16x32xf32>
    %229 = arith.mulf %224, %228 : vector<16x32xf32>
    %230 = vector.broadcast %209 : vector<1x32xf32> to vector<16x32xf32>
    %231 = arith.mulf %229, %230 : vector<16x32xf32>
    %232 = vector.broadcast %211 : vector<1x32xf32> to vector<16x32xf32>
    %233 = arith.addf %231, %232 : vector<16x32xf32>
    %c1_112 = arith.constant 1 : index
    %c0_113 = arith.constant 0 : index
    %c0_114 = arith.constant 0 : index
    %234 = vector.load %arg13[%c1_112, %c0_113, %c0_114] : memref<2x32x128xbf16, #tpu.memory_space<vmem>>, vector<1x32x128xbf16>
    %235 = vector.shape_cast %234 : vector<1x32x128xbf16> to vector<32x128xbf16>
    %236 = arith.truncf %233 : vector<16x32xf32> to vector<16x32xbf16>
    %cst_115 = arith.constant dense<0.000000e+00> : vector<16x128xf32>
    %237 = tpu.matmul %236, %235, %cst_115 {dimension_numbers = #tpu.dot_dimension_numbers<[1], [0], [0], [1], [0, 0, 1, 1], [], []>} : vector<16x32xbf16>, vector<32x128xbf16>, vector<16x128xf32> -> vector<16x128xf32>
    %c1_116 = arith.constant 1 : index
    %c0_117 = arith.constant 0 : index
    %c0_118 = arith.constant 0 : index
    %238 = vector.load %arg14[%c1_116, %c0_117, %c0_118] : memref<2x1x128xf32, #tpu.memory_space<vmem>>, vector<1x1x128xf32>
    %239 = vector.shape_cast %238 : vector<1x1x128xf32> to vector<1x128xf32>
    %240 = vector.broadcast %239 : vector<1x128xf32> to vector<16x128xf32>
    %241 = arith.addf %237, %240 : vector<16x128xf32>
    %cst_119 = arith.constant 5.000000e-01 : f32
    %242 = vector.broadcast %cst_119 : f32 to vector<16x128xf32>
    %243 = arith.mulf %242, %241 : vector<16x128xf32>
    %cst_120 = arith.constant 0.707106769 : f32
    %244 = vector.broadcast %cst_120 : f32 to vector<16x128xf32>
    %245 = arith.mulf %241, %244 : vector<16x128xf32>
    %cst_121 = arith.constant 0.000000e+00 : f32
    %246 = vector.broadcast %cst_121 : f32 to vector<16x128xf32>
    %247 = arith.cmpf oge, %245, %246 : vector<16x128xf32>
    %cst_122 = arith.constant 1.000000e+00 : f32
    %cst_123 = arith.constant -1.000000e+00 : f32
    %248 = vector.broadcast %cst_122 : f32 to vector<16x128xf32>
    %249 = vector.broadcast %cst_123 : f32 to vector<16x128xf32>
    %250 = arith.select %247, %248, %249 : vector<16x128xi1>, vector<16x128xf32>
    %251 = math.absf %245 : vector<16x128xf32>
    %cst_124 = arith.constant 0.327591091 : f32
    %252 = vector.broadcast %cst_124 : f32 to vector<16x128xf32>
    %253 = arith.mulf %252, %251 : vector<16x128xf32>
    %cst_125 = arith.constant 1.000000e+00 : f32
    %254 = vector.broadcast %cst_125 : f32 to vector<16x128xf32>
    %255 = arith.addf %254, %253 : vector<16x128xf32>
    %cst_126 = arith.constant 1.000000e+00 : f32
    %256 = vector.broadcast %cst_126 : f32 to vector<16x128xf32>
    %257 = arith.divf %256, %255 : vector<16x128xf32>
    %cst_127 = arith.constant 1.06140542 : f32
    %258 = vector.broadcast %cst_127 : f32 to vector<16x128xf32>
    %259 = arith.mulf %258, %257 : vector<16x128xf32>
    %cst_128 = arith.constant -1.45315206 : f32
    %260 = vector.broadcast %cst_128 : f32 to vector<16x128xf32>
    %261 = arith.addf %259, %260 : vector<16x128xf32>
    %262 = arith.mulf %261, %257 : vector<16x128xf32>
    %cst_129 = arith.constant 1.42141378 : f32
    %263 = vector.broadcast %cst_129 : f32 to vector<16x128xf32>
    %264 = arith.addf %262, %263 : vector<16x128xf32>
    %265 = arith.mulf %264, %257 : vector<16x128xf32>
    %cst_130 = arith.constant -0.284496725 : f32
    %266 = vector.broadcast %cst_130 : f32 to vector<16x128xf32>
    %267 = arith.addf %265, %266 : vector<16x128xf32>
    %268 = arith.mulf %267, %257 : vector<16x128xf32>
    %cst_131 = arith.constant 0.254829586 : f32
    %269 = vector.broadcast %cst_131 : f32 to vector<16x128xf32>
    %270 = arith.addf %268, %269 : vector<16x128xf32>
    %271 = arith.mulf %270, %257 : vector<16x128xf32>
    %cst_132 = arith.constant 0.000000e+00 : f32
    %272 = vector.broadcast %cst_132 : f32 to vector<16x128xf32>
    %273 = arith.subf %272, %251 : vector<16x128xf32>
    %274 = arith.mulf %273, %251 : vector<16x128xf32>
    %275 = math.exp %274 : vector<16x128xf32>
    %276 = arith.mulf %271, %275 : vector<16x128xf32>
    %cst_133 = arith.constant 1.000000e+00 : f32
    %277 = vector.broadcast %cst_133 : f32 to vector<16x128xf32>
    %278 = arith.subf %277, %276 : vector<16x128xf32>
    %279 = arith.mulf %250, %278 : vector<16x128xf32>
    %cst_134 = arith.constant 1.000000e+00 : f32
    %280 = vector.broadcast %cst_134 : f32 to vector<16x128xf32>
    %281 = arith.addf %280, %279 : vector<16x128xf32>
    %282 = arith.mulf %243, %281 : vector<16x128xf32>
    %c1_135 = arith.constant 1 : index
    %c0_136 = arith.constant 0 : index
    %c0_137 = arith.constant 0 : index
    %283 = vector.load %arg15[%c1_135, %c0_136, %c0_137] : memref<2x128x32xbf16, #tpu.memory_space<vmem>>, vector<1x128x32xbf16>
    %284 = vector.shape_cast %283 : vector<1x128x32xbf16> to vector<128x32xbf16>
    %285 = arith.truncf %282 : vector<16x128xf32> to vector<16x128xbf16>
    %cst_138 = arith.constant dense<0.000000e+00> : vector<16x32xf32>
    %286 = tpu.matmul %285, %284, %cst_138 {dimension_numbers = #tpu.dot_dimension_numbers<[1], [0], [0], [1], [0, 0, 1, 1], [], []>} : vector<16x128xbf16>, vector<128x32xbf16>, vector<16x32xf32> -> vector<16x32xf32>
    %287 = arith.addf %207, %286 : vector<16x32xf32>
    %c1_139 = arith.constant 1 : index
    %c0_140 = arith.constant 0 : index
    %c0_141 = arith.constant 0 : index
    %288 = vector.load %arg16[%c1_139, %c0_140, %c0_141] : memref<2x1x32xf32, #tpu.memory_space<vmem>>, vector<1x1x32xf32>
    %289 = vector.shape_cast %288 : vector<1x1x32xf32> to vector<1x32xf32>
    %290 = vector.broadcast %289 : vector<1x32xf32> to vector<16x32xf32>
    %291 = arith.addf %287, %290 : vector<16x32xf32>
    %c0_142 = arith.constant 0 : index
    %c0_143 = arith.constant 0 : index
    %292 = vector.load %arg17[%c0_142, %c0_143] : memref<1x32xf32, #tpu.memory_space<vmem>>, vector<1x32xf32>
    %c0_144 = arith.constant 0 : index
    %c0_145 = arith.constant 0 : index
    %293 = vector.load %arg18[%c0_144, %c0_145] : memref<1x32xf32, #tpu.memory_space<vmem>>, vector<1x32xf32>
    %cst_146 = arith.constant dense<0.000000e+00> : vector<16xf32>
    %294 = vector.multi_reduction <add>, %291, %cst_146 [1] : vector<16x32xf32> to vector<16xf32>
    %295 = vector.shape_cast %294 : vector<16xf32> to vector<16x1xf32>
    %cst_147 = arith.constant 3.200000e+01 : f32
    %296 = vector.broadcast %cst_147 : f32 to vector<16x1xf32>
    %297 = arith.divf %295, %296 : vector<16x1xf32>
    %298 = vector.broadcast %297 : vector<16x1xf32> to vector<16x32xf32>
    %299 = arith.subf %291, %298 : vector<16x32xf32>
    %300 = arith.mulf %299, %299 : vector<16x32xf32>
    %cst_148 = arith.constant dense<0.000000e+00> : vector<16xf32>
    %301 = vector.multi_reduction <add>, %300, %cst_148 [1] : vector<16x32xf32> to vector<16xf32>
    %302 = vector.shape_cast %301 : vector<16xf32> to vector<16x1xf32>
    %cst_149 = arith.constant 3.200000e+01 : f32
    %303 = vector.broadcast %cst_149 : f32 to vector<16x1xf32>
    %304 = arith.divf %302, %303 : vector<16x1xf32>
    %305 = vector.broadcast %297 : vector<16x1xf32> to vector<16x32xf32>
    %306 = arith.subf %291, %305 : vector<16x32xf32>
    %cst_150 = arith.constant 9.99999974E-6 : f32
    %307 = vector.broadcast %cst_150 : f32 to vector<16x1xf32>
    %308 = arith.addf %304, %307 : vector<16x1xf32>
    %309 = math.rsqrt %308 : vector<16x1xf32>
    %310 = vector.broadcast %309 : vector<16x1xf32> to vector<16x32xf32>
    %311 = arith.mulf %306, %310 : vector<16x32xf32>
    %312 = vector.broadcast %292 : vector<1x32xf32> to vector<16x32xf32>
    %313 = arith.mulf %311, %312 : vector<16x32xf32>
    %314 = vector.broadcast %293 : vector<1x32xf32> to vector<16x32xf32>
    %315 = arith.addf %313, %314 : vector<16x32xf32>
    %c0_151 = arith.constant 0 : index
    %c0_152 = arith.constant 0 : index
    %316 = vector.load %arg19[%c0_151, %c0_152] : memref<32x128xbf16, #tpu.memory_space<vmem>>, vector<32x128xbf16>
    %317 = arith.truncf %315 : vector<16x32xf32> to vector<16x32xbf16>
    %cst_153 = arith.constant dense<0.000000e+00> : vector<16x128xf32>
    %318 = tpu.matmul %317, %316, %cst_153 {dimension_numbers = #tpu.dot_dimension_numbers<[1], [0], [0], [1], [0, 0, 1, 1], [], []>} : vector<16x32xbf16>, vector<32x128xbf16>, vector<16x128xf32> -> vector<16x128xf32>
    %c0_154 = arith.constant 0 : index
    %c0_155 = arith.constant 0 : index
    %319 = vector.load %arg20[%c0_154, %c0_155] : memref<1x128xf32, #tpu.memory_space<vmem>>, vector<1x128xf32>
    %320 = vector.broadcast %319 : vector<1x128xf32> to vector<16x128xf32>
    %321 = arith.addf %318, %320 : vector<16x128xf32>
    %c0_156 = arith.constant 0 : index
    %c0_157 = arith.constant 0 : index
    %322 = vector.load %arg21[%c0_156, %c0_157] : memref<16x128xf32, #tpu.memory_space<vmem>>, vector<16x128xf32>
    tpu.vector_store %arg21[%c0_156, %c0_157], %321 {strides = array<i32>} : memref<16x128xf32, #tpu.memory_space<vmem>>, vector<16x128xf32>,
    return
  }
  func.func @transform_0(%arg0: i32) -> (i32, i32) {
    %c0_i32 = arith.constant 0 : i32
    %c0_i32_0 = arith.constant 0 : i32
    %c0_i32_1 = arith.constant 0 : i32
    return %c0_i32, %c0_i32_0 : i32, i32
  }
  func.func @transform_1(%arg0: i32) -> (i32, i32) {
    %c0_i32 = arith.constant 0 : i32
    %c0_i32_0 = arith.constant 0 : i32
    %c0_i32_1 = arith.constant 0 : i32
    return %c0_i32, %c0_i32_0 : i32, i32
  }
  func.func @transform_2(%arg0: i32) -> (i32, i32) {
    %c0_i32 = arith.constant 0 : i32
    %c0_i32_0 = arith.constant 0 : i32
    %c0_i32_1 = arith.constant 0 : i32
    return %c0_i32, %c0_i32_0 : i32, i32
  }
  func.func @transform_3(%arg0: i32) -> (i32, i32) {
    %c0_i32 = arith.constant 0 : i32
    %c0_i32_0 = arith.constant 0 : i32
    %c0_i32_1 = arith.constant 0 : i32
    return %c0_i32, %c0_i32_0 : i32, i32
  }
  func.func @transform_4(%arg0: i32) -> (i32, i32) {
    %c0_i32 = arith.constant 0 : i32
    %c0_i32_0 = arith.constant 0 : i32
    %c0_i32_1 = arith.constant 0 : i32
    return %c0_i32, %c0_i32_0 : i32, i32
  }
  func.func @transform_5(%arg0: i32) -> (i32, i32, i32) {
    %c0_i32 = arith.constant 0 : i32
    %c0_i32_0 = arith.constant 0 : i32
    %c0_i32_1 = arith.constant 0 : i32
    %c0_i32_2 = arith.constant 0 : i32
    return %c0_i32, %c0_i32_0, %c0_i32_1 : i32, i32, i32
  }
  func.func @transform_6(%arg0: i32) -> (i32, i32, i32) {
    %c0_i32 = arith.constant 0 : i32
    %c0_i32_0 = arith.constant 0 : i32
    %c0_i32_1 = arith.constant 0 : i32
    %c0_i32_2 = arith.constant 0 : i32
    return %c0_i32, %c0_i32_0, %c0_i32_1 : i32, i32, i32
  }
  func.func @transform_7(%arg0: i32) -> (i32, i32, i32) {
    %c0_i32 = arith.constant 0 : i32
    %c0_i32_0 = arith.constant 0 : i32
    %c0_i32_1 = arith.constant 0 : i32
    %c0_i32_2 = arith.constant 0 : i32
    return %c0_i32, %c0_i32_0, %c0_i32_1 : i32, i32, i32
  }
  func.func @transform_8(%arg0: i32) -> (i32, i32, i32) {
    %c0_i32 = arith.constant 0 : i32
    %c0_i32_0 = arith.constant 0 : i32
    %c0_i32_1 = arith.constant 0 : i32
    %c0_i32_2 = arith.constant 0 : i32
    return %c0_i32, %c0_i32_0, %c0_i32_1 : i32, i32, i32
  }
  func.func @transform_9(%arg0: i32) -> (i32, i32, i32) {
    %c0_i32 = arith.constant 0 : i32
    %c0_i32_0 = arith.constant 0 : i32
    %c0_i32_1 = arith.constant 0 : i32
    %c0_i32_2 = arith.constant 0 : i32
    return %c0_i32, %c0_i32_0, %c0_i32_1 : i32, i32, i32
  }
  func.func @transform_10(%arg0: i32) -> (i32, i32, i32) {
    %c0_i32 = arith.constant 0 : i32
    %c0_i32_0 = arith.constant 0 : i32
    %c0_i32_1 = arith.constant 0 : i32
    %c0_i32_2 = arith.constant 0 : i32
    return %c0_i32, %c0_i32_0, %c0_i32_1 : i32, i32, i32
  }
  func.func @transform_11(%arg0: i32) -> (i32, i32, i32) {
    %c0_i32 = arith.constant 0 : i32
    %c0_i32_0 = arith.constant 0 : i32
    %c0_i32_1 = arith.constant 0 : i32
    %c0_i32_2 = arith.constant 0 : i32
    return %c0_i32, %c0_i32_0, %c0_i32_1 : i32, i32, i32
  }
  func.func @transform_12(%arg0: i32) -> (i32, i32, i32) {
    %c0_i32 = arith.constant 0 : i32
    %c0_i32_0 = arith.constant 0 : i32
    %c0_i32_1 = arith.constant 0 : i32
    %c0_i32_2 = arith.constant 0 : i32
    return %c0_i32, %c0_i32_0, %c0_i32_1 : i32, i32, i32
  }
  func.func @transform_13(%arg0: i32) -> (i32, i32, i32) {
    %c0_i32 = arith.constant 0 : i32
    %c0_i32_0 = arith.constant 0 : i32
    %c0_i32_1 = arith.constant 0 : i32
    %c0_i32_2 = arith.constant 0 : i32
    return %c0_i32, %c0_i32_0, %c0_i32_1 : i32, i32, i32
  }
  func.func @transform_14(%arg0: i32) -> (i32, i32, i32) {
    %c0_i32 = arith.constant 0 : i32
    %c0_i32_0 = arith.constant 0 : i32
    %c0_i32_1 = arith.constant 0 : i32
    %c0_i32_2 = arith.constant 0 : i32
    return %c0_i32, %c0_i32_0, %c0_i32_1 : i32, i32, i32
  }
  func.func @transform_15(%arg0: i32) -> (i32, i32, i32) {
    %c0_i32 = arith.constant 0 : i32
    %c0_i32_0 = arith.constant 0 : i32
    %c0_i32_1 = arith.constant 0 : i32
    %c0_i32_2 = arith.constant 0 : i32
    return %c0_i32, %c0_i32_0, %c0_i32_1 : i32, i32, i32
  }
  func.func @transform_16(%arg0: i32) -> (i32, i32) {
    %c0_i32 = arith.constant 0 : i32
    %c0_i32_0 = arith.constant 0 : i32
    %c0_i32_1 = arith.constant 0 : i32
    return %c0_i32, %c0_i32_0 : i32, i32
  }
  func.func @transform_17(%arg0: i32) -> (i32, i32) {
    %c0_i32 = arith.constant 0 : i32
    %c0_i32_0 = arith.constant 0 : i32
    %c0_i32_1 = arith.constant 0 : i32
    return %c0_i32, %c0_i32_0 : i32, i32
  }
  func.func @transform_18(%arg0: i32) -> (i32, i32) {
    %c0_i32 = arith.constant 0 : i32
    %c0_i32_0 = arith.constant 0 : i32
    %c0_i32_1 = arith.constant 0 : i32
    return %c0_i32, %c0_i32_0 : i32, i32
  }
  func.func @transform_19(%arg0: i32) -> (i32, i32) {
    %c0_i32 = arith.constant 0 : i32
    %c0_i32_0 = arith.constant 0 : i32
    %c0_i32_1 = arith.constant 0 : i32
    return %c0_i32, %c0_i32_0 : i32, i32
  }
  func.func @transform_20(%arg0: i32) -> (i32, i32) {
    %c0_i32 = arith.constant 0 : i32
    %c0_i32_0 = arith.constant 0 : i32
    %c0_i32_1 = arith.constant 0 : i32
    return %c0_i32, %c0_i32_0 : i32, i32
  }
}

</mosaic_0001>

<llo_original>
// kernel: vit_forward.1
$region0: #{vit_forward.1}
  #allocation0 [shape = 'u32[]', space=smem, size = 0x4, offset = 0x4, fixed_abs, tag = 'smem constant byte address 0x4 - core index']
  #allocation1 [shape = 'u32[144,128]{1,0:T(1,128)}', space=vmem, size = 0x12000, scoped, tag = 'internal scratch']
  %s0 = inlined_call_operand.vmem [shape: f32[16,192], index: 0, kind: input, shape index: {}]
  %s1 = inlined_call_operand.vmem [shape: f32[16,32], index: 1, kind: input, shape index: {}]
  %s2 = inlined_call_operand.vmem [shape: f32[16,1], index: 2, kind: input, shape index: {}]
  %s3 = inlined_call_operand.vmem [shape: f32[32,32], index: 3, kind: input, shape index: {}]
  %s4 = inlined_call_operand.vmem [shape: bf16[192,32], index: 4, kind: input, shape index: {}]
  %s5 = inlined_call_operand.vmem [shape: f32[2,1,32], index: 5, kind: input, shape index: {}]
  %s6 = inlined_call_operand.vmem [shape: f32[2,1,32], index: 6, kind: input, shape index: {}]
  %s7 = inlined_call_operand.vmem [shape: bf16[2,32,96], index: 7, kind: input, shape index: {}]
  %s8 = inlined_call_operand.vmem [shape: bf16[2,32,32], index: 8, kind: input, shape index: {}]
  %s9 = inlined_call_operand.vmem [shape: f32[2,1,32], index: 9, kind: input, shape index: {}]
  %s10 = inlined_call_operand.vmem [shape: f32[2,1,32], index: 10, kind: input, shape index: {}]
  %s11 = inlined_call_operand.vmem [shape: f32[2,1,32], index: 11, kind: input, shape index: {}]
  %s12 = inlined_call_operand.vmem [shape: bf16[2,32,128], index: 12, kind: input, shape index: {}]
  %s13 = inlined_call_operand.vmem [shape: f32[2,1,128], index: 13, kind: input, shape index: {}]
  %s14 = inlined_call_operand.vmem [shape: bf16[2,128,32], index: 14, kind: input, shape index: {}]
  %s15 = inlined_call_operand.vmem [shape: f32[2,1,32], index: 15, kind: input, shape index: {}]
  %s16 = inlined_call_operand.vmem [shape: f32[1,32], index: 16, kind: input, shape index: {}]
  %s17 = inlined_call_operand.vmem [shape: f32[1,32], index: 17, kind: input, shape index: {}]
  %s18 = inlined_call_operand.vmem [shape: bf16[32,128], index: 18, kind: input, shape index: {}]
  %s19 = inlined_call_operand.vmem [shape: f32[1,128], index: 19, kind: input, shape index: {}]
  %s20 = inlined_call_operand.vmem [shape: f32[16,128], index: 20, kind: output, shape index: {}]
  %s21 = sld [smem:[#allocation0]]
  $region90: #{vit_forward.1} parent=0
    _
  %s23 = ssub.s32 1, %s21
  %s24 = scalar_select 0, %s23, %s21
  // Predicated region
  $region2: #{vit_forward.1} parent=0 // pred_check
    _
  $region3: #{vit_forward.1} parent=0 // pred_check_branch
    %26 = sbr.rel (0) target = $region5
  $region4: #{vit_forward.1} parent=0 // pred_region
    _
  $region5: #{vit_forward.1} parent=0 // pred_fallthru
    _
  // Predicated region
  $region6: #{vit_forward.1} parent=0 // pred_check
    _
  $region7: #{vit_forward.1} parent=0 // pred_check_branch
    %28 = sbr.rel (0) target = $region9
  $region8: #{vit_forward.1} parent=0 // pred_region
    _
  $region9: #{vit_forward.1} parent=0 // pred_fallthru
    _
  // Predicated region
  $region10: #{vit_forward.1} parent=0 // pred_check
    _
  $region11: #{vit_forward.1} parent=0 // pred_check_branch
    %30 = sbr.rel (0) target = $region13
  $region12: #{vit_forward.1} parent=0 // pred_region
    _
  $region13: #{vit_forward.1} parent=0 // pred_fallthru
    _
  // Predicated region
  $region14: #{vit_forward.1} parent=0 // pred_check
    _
  $region15: #{vit_forward.1} parent=0 // pred_check_branch
    %32 = sbr.rel (0) target = $region17
  $region16: #{vit_forward.1} parent=0 // pred_region
    _
  $region17: #{vit_forward.1} parent=0 // pred_fallthru
    _
  // Predicated region
  $region18: #{vit_forward.1} parent=0 // pred_check
    _
  $region19: #{vit_forward.1} parent=0 // pred_check_branch
    %34 = sbr.rel (0) target = $region21
  $region20: #{vit_forward.1} parent=0 // pred_region
    _
  $region21: #{vit_forward.1} parent=0 // pred_fallthru
    _
  // Predicated region
  $region22: #{vit_forward.1} parent=0 // pred_check
    _
  $region23: #{vit_forward.1} parent=0 // pred_check_branch
    %36 = sbr.rel (0) target = $region25
  $region24: #{vit_forward.1} parent=0 // pred_region
    _
  $region25: #{vit_forward.1} parent=0 // pred_fallthru
    _
  // Predicated region
  $region26: #{vit_forward.1} parent=0 // pred_check
    _
  $region27: #{vit_forward.1} parent=0 // pred_check_branch
    %38 = sbr.rel (0) target = $region29
  $region28: #{vit_forward.1} parent=0 // pred_region
    _
  $region29: #{vit_forward.1} parent=0 // pred_fallthru
    _
  // Predicated region
  $region30: #{vit_forward.1} parent=0 // pred_check
    _
  $region31: #{vit_forward.1} parent=0 // pred_check_branch
    %40 = sbr.rel (0) target = $region33
  $region32: #{vit_forward.1} parent=0 // pred_region
    _
  $region33: #{vit_forward.1} parent=0 // pred_fallthru
    _
  // Predicated region
  $region34: #{vit_forward.1} parent=0 // pred_check
    _
  $region35: #{vit_forward.1} parent=0 // pred_check_branch
    %42 = sbr.rel (0) target = $region37
  $region36: #{vit_forward.1} parent=0 // pred_region
    _
  $region37: #{vit_forward.1} parent=0 // pred_fallthru
    _
  // Predicated region
  $region38: #{vit_forward.1} parent=0 // pred_check
    _
  $region39: #{vit_forward.1} parent=0 // pred_check_branch
    %44 = sbr.rel (0) target = $region41
  $region40: #{vit_forward.1} parent=0 // pred_region
    _
  $region41: #{vit_forward.1} parent=0 // pred_fallthru
    _
  // Predicated region
  $region42: #{vit_forward.1} parent=0 // pred_check
    _
  $region43: #{vit_forward.1} parent=0 // pred_check_branch
    %46 = sbr.rel (0) target = $region45
  $region44: #{vit_forward.1} parent=0 // pred_region
    _
  $region45: #{vit_forward.1} parent=0 // pred_fallthru
    _
  // Predicated region
  $region46: #{vit_forward.1} parent=0 // pred_check
    _
  $region47: #{vit_forward.1} parent=0 // pred_check_branch
    %48 = sbr.rel (0) target = $region49
  $region48: #{vit_forward.1} parent=0 // pred_region
    _
  $region49: #{vit_forward.1} parent=0 // pred_fallthru
    _
  // Predicated region
  $region50: #{vit_forward.1} parent=0 // pred_check
    _
  $region51: #{vit_forward.1} parent=0 // pred_check_branch
    %50 = sbr.rel (0) target = $region53
  $region52: #{vit_forward.1} parent=0 // pred_region
    _
  $region53: #{vit_forward.1} parent=0 // pred_fallthru
    _
  // Predicated region
  $region54: #{vit_forward.1} parent=0 // pred_check
    _
  $region55: #{vit_forward.1} parent=0 // pred_check_branch
    %52 = sbr.rel (0) target = $region57
  $region56: #{vit_forward.1} parent=0 // pred_region
    _
  $region57: #{vit_forward.1} parent=0 // pred_fallthru
    _
  // Predicated region
  $region58: #{vit_forward.1} parent=0 // pred_check
    _
  $region59: #{vit_forward.1} parent=0 // pred_check_branch
    %54 = sbr.rel (0) target = $region61
  $region60: #{vit_forward.1} parent=0 // pred_region
    _
  $region61: #{vit_forward.1} parent=0 // pred_fallthru
    _
  // Predicated region
  $region62: #{vit_forward.1} parent=0 // pred_check
    _
  $region63: #{vit_forward.1} parent=0 // pred_check_branch
    %56 = sbr.rel (0) target = $region65
  $region64: #{vit_forward.1} parent=0 // pred_region
    _
  $region65: #{vit_forward.1} parent=0 // pred_fallthru
    _
  // Predicated region
  $region66: #{vit_forward.1} parent=0 // pred_check
    _
  $region67: #{vit_forward.1} parent=0 // pred_check_branch
    %58 = sbr.rel (0) target = $region69
  $region68: #{vit_forward.1} parent=0 // pred_region
    _
  $region69: #{vit_forward.1} parent=0 // pred_fallthru
    _
  // Predicated region
  $region70: #{vit_forward.1} parent=0 // pred_check
    _
  $region71: #{vit_forward.1} parent=0 // pred_check_branch
    %60 = sbr.rel (0) target = $region73
  $region72: #{vit_forward.1} parent=0 // pred_region
    _
  $region73: #{vit_forward.1} parent=0 // pred_fallthru
    _
  // Predicated region
  $region74: #{vit_forward.1} parent=0 // pred_check
    _
  $region75: #{vit_forward.1} parent=0 // pred_check_branch
    %62 = sbr.rel (0) target = $region77
  $region76: #{vit_forward.1} parent=0 // pred_region
    _
  $region77: #{vit_forward.1} parent=0 // pred_fallthru
    _
  // Predicated region
  $region78: #{vit_forward.1} parent=0 // pred_check
    _
  $region79: #{vit_forward.1} parent=0 // pred_check_branch
    %64 = sbr.rel (0) target = $region81
  $region80: #{vit_forward.1} parent=0 // pred_region
    _
  $region81: #{vit_forward.1} parent=0 // pred_fallthru
    _
  %v66 = vld [vmem:[%s0] sm:$0xff]
  %v67 = vld [vmem:[%s0 + $0x8] sm:$0xff]
  %v68 = vld [vmem:[%s0 + $0x10] sm:$0xff]
  %v69 = vld [vmem:[%s0 + $0x18] sm:$0xff]
  %v70 = vld [vmem:[%s4] sm:$0xf]
  %v71 = vld [vmem:[%s4 + $0x4] sm:$0xf]
  %v72 = vld [vmem:[%s4 + $0x8] sm:$0xf]
  %v73 = vld [vmem:[%s4 + $0xc] sm:$0xf]
  %v74 = vld [vmem:[%s4 + $0x10] sm:$0xf]
  %v75 = vld [vmem:[%s4 + $0x14] sm:$0xf]
  %v76 = vld [vmem:[%s4 + $0x18] sm:$0xf]
  %v77 = vld [vmem:[%s4 + $0x1c] sm:$0xf]
  %v78 = vld [vmem:[%s4 + $0x20] sm:$0xf]
  %v79 = vld [vmem:[%s4 + $0x24] sm:$0xf]
  %v80 = vld [vmem:[%s4 + $0x28] sm:$0xf]
  %v81 = vld [vmem:[%s4 + $0x2c] sm:$0xf]
  %v82 = vld [vmem:[%s4 + $0x30] sm:$0xf]
  %v83 = vld [vmem:[%s4 + $0x34] sm:$0xf]
  %v84 = vld [vmem:[%s4 + $0x38] sm:$0xf]
  %v85 = vld [vmem:[%s4 + $0x3c] sm:$0xf]
  %v86 = vld [vmem:[%s4 + $0x40] sm:$0xf]
  %v87 = vld [vmem:[%s4 + $0x44] sm:$0xf]
  %v88 = vld [vmem:[%s4 + $0x48] sm:$0xf]
  %v89 = vld [vmem:[%s4 + $0x4c] sm:$0xf]
  %v90 = vld [vmem:[%s4 + $0x50] sm:$0xf]
  %v91 = vld [vmem:[%s4 + $0x54] sm:$0xf]
  %v92 = vld [vmem:[%s4 + $0x58] sm:$0xf]
  %v93 = vld [vmem:[%s4 + $0x5c] sm:$0xf]
  %v94 = vpack.c.bf16 %v68, %v66
  %v95 = vpack.c.bf16 %v69, %v67
  %v96 = vld [vmem:[%s1] sm:$0xff]
  %v97 = vld [vmem:[%s1 + $0x8] sm:$0xff]
  %v122 = vunpack.c.l.b16 %v70
  %v123 = vunpack.c.l.b16 %v71
  %v124 = vunpack.c.l.b16 %v72
  %v125 = vunpack.c.l.b16 %v73
  %v126 = vunpack.c.l.b16 %v74
  %v127 = vunpack.c.l.b16 %v75
  %v128 = vunpack.c.l.b16 %v76
  %v129 = vunpack.c.l.b16 %v77
  %v130 = vunpack.c.l.b16 %v78
  %v131 = vunpack.c.l.b16 %v79
  %v132 = vunpack.c.l.b16 %v80
  %v133 = vunpack.c.l.b16 %v81
  %v134 = vunpack.c.l.b16 %v82
  %v135 = vunpack.c.l.b16 %v83
  %v136 = vunpack.c.l.b16 %v84
  %v137 = vunpack.c.l.b16 %v85
  %v138 = vunpack.c.l.b16 %v86
  %v139 = vunpack.c.l.b16 %v87
  %v140 = vunpack.c.l.b16 %v88
  %v141 = vunpack.c.l.b16 %v89
  %v142 = vunpack.c.l.b16 %v90
  %v143 = vunpack.c.l.b16 %v91
  %v144 = vunpack.c.l.b16 %v92
  %v145 = vunpack.c.l.b16 %v93
  %v146 = vpack.c.b16 %v123, %v122
  %v147 = vpack.c.b16 %v125, %v124
  %v148 = vpack.c.b16 %v127, %v126
  %v149 = vpack.c.b16 %v129, %v128
  %v150 = vpack.c.b16 %v131, %v130
  %v151 = vpack.c.b16 %v133, %v132
  %v152 = vpack.c.b16 %v135, %v134
  %v153 = vpack.c.b16 %v137, %v136
  %v154 = vpack.c.b16 %v139, %v138
  %v155 = vpack.c.b16 %v141, %v140
  %v156 = vpack.c.b16 %v143, %v142
  %v157 = vpack.c.b16 %v145, %v144
  %vm170 = vcmask 523264
  %v172 = vsel %vm170, %v95, 0
  %174 = vmatprep.subr.bf16.mxu0 0
  %175 = vmatpush1.bf16.msra.mxu0 %v146
  %176 = vmatprep.subr.bf16.mxu0 0
  %177 = vmatpush1.bf16.msra.mxu0 %v147
  %178 = vmatprep.subr.bf16.mxu0 0
  %179 = vmatpush1.bf16.msra.mxu0 %v148
  %180 = vmatprep.subr.bf16.mxu0 0
  %181 = vmatpush1.bf16.msra.mxu0 %v149
  %182 = vmatprep.subr.bf16.mxu0 0
  %183 = vmatpush1.bf16.msra.mxu0 %v150
  %184 = vmatprep.subr.bf16.mxu0 0
  %185 = vmatpush1.bf16.msra.mxu0 %v151
  %186 = vmatprep.subr.bf16.mxu0 0
  %187 = vmatpush1.bf16.msra.mxu0 %v152
  %188 = vmatprep.subr.bf16.mxu0 0
  %189 = vmatpush1.bf16.msra.mxu0 %v153
  %190 = vmatprep.subr.bf16.mxu0 0
  %191 = vmatpush1.bf16.msra.mxu0 %v154
  %192 = vmatprep.subr.bf16.mxu0 0
  %193 = vmatpush1.bf16.msra.mxu0 %v155
  %194 = vmatprep.subr.bf16.mxu0 0
  %195 = vmatpush1.bf16.msra.mxu0 %v156
  %196 = vmatprep.subr.bf16.mxu0 0
  %197 = vmatpush1.bf16.msra.mxu0 %v157
  %198 = vmatprep.subr.bf16.mxu0 0
  %199 = vmatpush1.bf16.msra.mxu0 0
  %200 = vmatprep.subr.bf16.mxu0 0
  %201 = vmatpush1.bf16.msra.mxu0 0
  %202 = vmatprep.subr.bf16.mxu0 0
  %203 = vmatpush1.bf16.msra.mxu0 0
  %204 = vmatprep.subr.bf16.mxu0 0
  %205 = vmatpush1.bf16.msra.mxu0 0
  %206 = vmatprep.mubr.bf16.mxu0 %v172
  %207 = vmatmul.mubr.bf16.gmra.mrb[0].mxu0 %v94
  %v208 = vpop.f32.mrb[0].mxu0
  %v209 = vadd.f32 %v96, %v208
  %v210 = vpop.f32.mrb[0].mxu0
  %v211 = vpop.f32.mrb[0].mxu0
  %v212 = vadd.f32 %v97, %v211
  %v213 = vpop.f32.mrb[0].mxu0
  %214 = vdwg.mxu0
  %v215 = vld [vmem:[%s2] sm:$0xff]
  %v216 = vld [vmem:[%s2 + $0x8] sm:$0xff]
  %v217 = vld [vmem:[%s3] sm:$0xff]
  %v218 = vld [vmem:[%s3 + $0x8] sm:$0xff]
  %v219 = vld [vmem:[%s3 + $0x10] sm:$0xff]
  %v220 = vld [vmem:[%s3 + $0x18] sm:$0xff]
  %v221 = vld [vmem:[%s5] sm:$0x1]
  %v222 = vld [vmem:[%s6] sm:$0x1]
  %vm223 = vcmask 261120
  %v224 = vsel %vm223, %v209, 0.0
  %225 = vadd.xlane.f32.xlu0 %v224
  %v226 = vpop.xlane.xlu0 %225
  %v227 = vsel %vm223, %v212, 0.0
  %228 = vadd.xlane.f32.xlu0 %v227
  %v229 = vpop.xlane.xlu0 %228
  %v230 = vrcp.pop 32.0
  %v231 = vmul.f32 %v226, %v230
  %v232 = vmul.f32 %v229, %v230
  %v233 = vsub.f32 %v209, %v231
  %v234 = vsub.f32 %v212, %v232
  %v235 = vmul.f32 %v233, %v233
  %v236 = vmul.f32 %v234, %v234
  %v237 = vsel %vm223, %v235, 0.0
  %238 = vadd.xlane.f32.xlu0 %v237
  %v239 = vpop.xlane.xlu0 %238
  %v240 = vsel %vm223, %v236, 0.0
  %241 = vadd.xlane.f32.xlu0 %v240
  %v242 = vpop.xlane.xlu0 %241
  %v243 = vmul.f32 %v239, %v230
  %v244 = vmul.f32 %v242, %v230
  %v245 = vadd.f32 %v243, 1e-05
  %v246 = vadd.f32 %v244, 1e-05
  %v247 = vrsqrt.pop %v245
  %v248 = vrsqrt.pop %v246
  %v249 = vmul.f32 %v233, %v247
  %v250 = vmul.f32 %v234, %v248
  %v252 = vlaneseq
  %v253 = vshrl.u32 %v252, 7
  %v254 = vsub.s32 0, %v253
  %v255 = vrot.slane %v221, %v254
  %v257 = vmul.f32 %v249, %v255
  %v258 = vmul.f32 %v250, %v255
  %v260 = vlaneseq
  %v261 = vshrl.u32 %v260, 7
  %v262 = vsub.s32 0, %v261
  %v263 = vrot.slane %v222, %v262
  %v265 = vadd.f32 %v257, %v263
  %v266 = vadd.f32 %v258, %v263
  %268 = vset.pattern.permute.xlu0 0
  %269 = vperm.xlu0 %268, %v215
  %v270 = vpop.permute.xlu0 %269
  %273 = vset.pattern.permute.xlu0 0
  %274 = vperm.xlu0 %273, %v216
  %v275 = vpop.permute.xlu0 %274
  %v277 = vmul.f32 %v265, %v270
  %v278 = vmul.f32 %v266, %v275
  %v279 = vld [vmem:[%s7] sm:$0xf]
  %v280 = vld [vmem:[%s7 + $0x4] sm:$0xf]
  %v281 = vld [vmem:[%s7 + $0x8] sm:$0xf]
  %v282 = vld [vmem:[%s7 + $0xc] sm:$0xf]
  %v283 = vpack.c.bf16 %v278, %v277
  %v288 = vunpack.c.l.b16 %v279
  %v289 = vunpack.c.l.b16 %v280
  %v290 = vunpack.c.l.b16 %v281
  %v291 = vunpack.c.l.b16 %v282
  %v292 = vpack.c.b16 %v289, %v288
  %v293 = vpack.c.b16 %v291, %v290
  %v297 = vsel %vm223, %v283, 0
  %299 = vmatprep.subr.bf16.mxu0 0
  %300 = vmatpush1.bf16.msra.mxu0 %v292
  %301 = vmatprep.subr.bf16.mxu0 0
  %302 = vmatpush1.bf16.msra.mxu0 %v293
  %303 = vmatprep.subr.bf16.mxu0 0
  %304 = vmatpush1.bf16.msra.mxu0 0
  %305 = vmatprep.subr.bf16.mxu0 0
  %306 = vmatpush1.bf16.msra.mxu0 0
  %307 = vmatprep.subr.bf16.mxu0 0
  %308 = vmatpush1.bf16.msra.mxu0 0
  %309 = vmatprep.subr.bf16.mxu0 0
  %310 = vmatpush1.bf16.msra.mxu0 0
  %311 = vmatprep.subr.bf16.mxu0 0
  %312 = vmatpush1.bf16.msra.mxu0 0
  %313 = vmatprep.subr.bf16.mxu0 0
  %314 = vmatpush1.bf16.msra.mxu0 0
  %315 = vmatprep.subr.bf16.mxu0 0
  %316 = vmatpush1.bf16.msra.mxu0 0
  %317 = vmatprep.subr.bf16.mxu0 0
  %318 = vmatpush1.bf16.msra.mxu0 0
  %319 = vmatprep.subr.bf16.mxu0 0
  %320 = vmatpush1.bf16.msra.mxu0 0
  %321 = vmatprep.subr.bf16.mxu0 0
  %322 = vmatpush1.bf16.msra.mxu0 0
  %323 = vmatprep.subr.bf16.mxu0 0
  %324 = vmatpush1.bf16.msra.mxu0 0
  %325 = vmatprep.subr.bf16.mxu0 0
  %326 = vmatpush1.bf16.msra.mxu0 0
  %327 = vmatprep.subr.bf16.mxu0 0
  %328 = vmatpush1.bf16.msra.mxu0 0
  %329 = vmatprep.subr.bf16.mxu0 0
  %330 = vmatpush1.bf16.msra.mxu0 0
  %331 = vmatprep.mubr.bf16.mxu0 0
  %332 = vmatmul.mubr.bf16.gmra.mrb[0].mxu0 %v297
  %v333 = vpop.f32.mrb[0].mxu0
  %v334 = vadd.f32 0.0, %v333
  %v335 = vpop.f32.mrb[0].mxu0
  %v336 = vpop.f32.mrb[0].mxu0
  %v337 = vadd.f32 0.0, %v336
  %v338 = vpop.f32.mrb[0].mxu0
  %339 = vdwg.mxu0
  %341 = vrot.lane.b32.xlu0 %v334, 96
  %v342 = vpop.permute.xlu0 %341
  %344 = vxpose.xlu0.b32.start [1/16] %v342, 128
  %345 = vxpose.xlu0.b32.cont [2/16] 0.0, 128
  %346 = vxpose.xlu0.b32.cont [3/16] 0.0, 128
  %347 = vxpose.xlu0.b32.cont [4/16] 0.0, 128
  %348 = vxpose.xlu0.b32.cont [5/16] 0.0, 128
  %349 = vxpose.xlu0.b32.cont [6/16] 0.0, 128
  %350 = vxpose.xlu0.b32.cont [7/16] 0.0, 128
  %351 = vxpose.xlu0.b32.cont [8/16] 0.0, 128
  %352 = vxpose.xlu0.b32.cont [9/16] 0.0, 128
  %353 = vxpose.xlu0.b32.cont [10/16] 0.0, 128
  %354 = vxpose.xlu0.b32.cont [11/16] 0.0, 128
  %355 = vxpose.xlu0.b32.cont [12/16] 0.0, 128
  %356 = vxpose.xlu0.b32.cont [13/16] 0.0, 128
  %357 = vxpose.xlu0.b32.cont [14/16] 0.0, 128
  %358 = vxpose.xlu0.b32.cont [15/16] 0.0, 128
  %359 = vxpose.xlu0.b32.end [16/16] 0.0, 128
  %v360 = vpop.trf.xlu0
  %v361 = vpop.trf.xlu0
  %v362 = vpop.trf.xlu0
  %v363 = vpop.trf.xlu0
  %v364 = vpop.trf.xlu0
  %v365 = vpop.trf.xlu0
  %v366 = vpop.trf.xlu0
  %v367 = vpop.trf.xlu0
  %v368 = vpop.trf.xlu0
  %v369 = vpop.trf.xlu0
  %v370 = vpop.trf.xlu0
  %v371 = vpop.trf.xlu0
  %v372 = vpop.trf.xlu0
  %v373 = vpop.trf.xlu0
  %v374 = vpop.trf.xlu0
  %v375 = vpop.trf.xlu0
  %376 = vrot.lane.b32.xlu0 %v334, 64
  %v377 = vpop.permute.xlu0 %376
  %vm379 = vcmask 64512
  %v381 = vsel %vm379, %v360, 0
  %v384 = vsel %vm379, %v361, 0
  %v387 = vsel %vm379, %v362, 0
  %v390 = vsel %vm379, %v363, 0
  %392 = vmatprep.subr.mxu0 0.0
  %393 = vmatpush1.msra.mxu0 %v377
  %394 = vmatprep.subr.mxu0 0.0
  %395 = vmatpush1.msra.mxu0 0.0
  %396 = vmatprep.subr.mxu0 0.0
  %397 = vmatpush1.msra.mxu0 0.0
  %398 = vmatprep.subr.mxu0 0.0
  %399 = vmatpush1.msra.mxu0 0.0
  %400 = vmatprep.subr.mxu0 0.0
  %401 = vmatpush1.msra.mxu0 0.0
  %402 = vmatprep.subr.mxu0 0.0
  %403 = vmatpush1.msra.mxu0 0.0
  %404 = vmatprep.subr.mxu0 0.0
  %405 = vmatpush1.msra.mxu0 0.0
  %406 = vmatprep.subr.mxu0 0.0
  %407 = vmatpush1.msra.mxu0 0.0
  %408 = vmatprep.subr.mxu0 0.0
  %409 = vmatpush1.msra.mxu0 0.0
  %410 = vmatprep.subr.mxu0 0.0
  %411 = vmatpush1.msra.mxu0 0.0
  %412 = vmatprep.subr.mxu0 0.0
  %413 = vmatpush1.msra.mxu0 0.0
  %414 = vmatprep.subr.mxu0 0.0
  %415 = vmatpush1.msra.mxu0 0.0
  %416 = vmatprep.subr.mxu0 0.0
  %417 = vmatpush1.msra.mxu0 0.0
  %418 = vmatprep.subr.mxu0 0.0
  %419 = vmatpush1.msra.mxu0 0.0
  %420 = vmatprep.subr.mxu0 0.0
  %421 = vmatpush1.msra.mxu0 0.0
  %422 = vmatprep.subr.mxu0 0.0
  %423 = vmatpush1.msra.mxu0 0.0
  %424 = vmatprep.subr.mxu0 0.0
  %425 = vmatpush1.msra.mxu0 0.0
  %426 = vmatprep.subr.mxu0 0.0
  %427 = vmatpush1.msra.mxu0 0.0
  %428 = vmatprep.subr.mxu0 0.0
  %429 = vmatpush1.msra.mxu0 0.0
  %430 = vmatprep.subr.mxu0 0.0
  %431 = vmatpush1.msra.mxu0 0.0
  %432 = vmatprep.subr.mxu0 0.0
  %433 = vmatpush1.msra.mxu0 0.0
  %434 = vmatprep.subr.mxu0 0.0
  %435 = vmatpush1.msra.mxu0 0.0
  %436 = vmatprep.subr.mxu0 0.0
  %437 = vmatpush1.msra.mxu0 0.0
  %438 = vmatprep.subr.mxu0 0.0
  %439 = vmatpush1.msra.mxu0 0.0
  %440 = vmatprep.subr.mxu0 0.0
  %441 = vmatpush1.msra.mxu0 0.0
  %442 = vmatprep.subr.mxu0 0.0
  %443 = vmatpush1.msra.mxu0 0.0
  %444 = vmatprep.subr.mxu0 0.0
  %445 = vmatpush1.msra.mxu0 0.0
  %446 = vmatprep.subr.mxu0 0.0
  %447 = vmatpush1.msra.mxu0 0.0
  %448 = vmatprep.subr.mxu0 0.0
  %449 = vmatpush1.msra.mxu0 0.0
  %450 = vmatprep.subr.mxu0 0.0
  %451 = vmatpush1.msra.mxu0 0.0
  %452 = vmatprep.subr.mxu0 0.0
  %453 = vmatpush1.msra.mxu0 0.0
  %454 = vmatprep.subr.mxu0 0.0
  %455 = vmatpush1.msra.mxu0 0.0
  %456 = vmatprep.mubr.f32.mxu0 0.0
  %457 = vmatmul.mubr.f32.gmra.mrb[0].mxu0 %v381
  %v458 = vpop.f32.mrb[0].mxu0
  %v459 = vadd.f32 0.0, %v458
  %v460 = vpop.f32.mrb[0].mxu0
  %461 = vmatprep.mubr.f32.mxu0 0.0
  %462 = vmatmul.mubr.f32.gmra.mrb[0].mxu0 %v384
  %v463 = vpop.f32.mrb[0].mxu0
  %v464 = vadd.f32 0.0, %v463
  %v465 = vpop.f32.mrb[0].mxu0
  %466 = vmatprep.mubr.f32.mxu0 0.0
  %467 = vmatmul.mubr.f32.gmra.mrb[0].mxu0 %v387
  %v468 = vpop.f32.mrb[0].mxu0
  %v469 = vadd.f32 0.0, %v468
  %v470 = vpop.f32.mrb[0].mxu0
  %471 = vmatprep.mubr.f32.mxu0 0.0
  %472 = vmatmul.mubr.f32.gmra.mrb[0].mxu0 %v390
  %v473 = vpop.f32.mrb[0].mxu0
  %v474 = vadd.f32 0.0, %v473
  %v475 = vpop.f32.mrb[0].mxu0
  %476 = vdwg.mxu0
  %v477 = vmul.f32 %v459, %v217
  %v478 = vmul.f32 %v464, %v218
  %v479 = vmul.f32 %v469, %v219
  %v480 = vmul.f32 %v474, %v220
  %v481 = vpack.c.bf16 %v334, %v334
  %v482 = vpack.c.bf16 %v478, %v477
  %v483 = vpack.c.bf16 %v480, %v479
  %v485 = vsel %vm223, %v481, 0
  %487 = vmatprep.subr.bf16.mxu0 0
  %488 = vmatpush1.bf16.msra.mxu0 %v482
  %489 = vmatprep.subr.bf16.mxu0 0
  %490 = vmatpush1.bf16.msra.mxu0 %v483
  %491 = vmatprep.subr.bf16.mxu0 0
  %492 = vmatpush1.bf16.msra.mxu0 0
  %493 = vmatprep.subr.bf16.mxu0 0
  %494 = vmatpush1.bf16.msra.mxu0 0
  %495 = vmatprep.subr.bf16.mxu0 0
  %496 = vmatpush1.bf16.msra.mxu0 0
  %497 = vmatprep.subr.bf16.mxu0 0
  %498 = vmatpush1.bf16.msra.mxu0 0
  %499 = vmatprep.subr.bf16.mxu0 0
  %500 = vmatpush1.bf16.msra.mxu0 0
  %501 = vmatprep.subr.bf16.mxu0 0
  %502 = vmatpush1.bf16.msra.mxu0 0
  %503 = vmatprep.subr.bf16.mxu0 0
  %504 = vmatpush1.bf16.msra.mxu0 0
  %505 = vmatprep.subr.bf16.mxu0 0
  %506 = vmatpush1.bf16.msra.mxu0 0
  %507 = vmatprep.subr.bf16.mxu0 0
  %508 = vmatpush1.bf16.msra.mxu0 0
  %509 = vmatprep.subr.bf16.mxu0 0
  %510 = vmatpush1.bf16.msra.mxu0 0
  %511 = vmatprep.subr.bf16.mxu0 0
  %512 = vmatpush1.bf16.msra.mxu0 0
  %513 = vmatprep.subr.bf16.mxu0 0
  %514 = vmatpush1.bf16.msra.mxu0 0
  %515 = vmatprep.subr.bf16.mxu0 0
  %516 = vmatpush1.bf16.msra.mxu0 0
  %517 = vmatprep.subr.bf16.mxu0 0
  %518 = vmatpush1.bf16.msra.mxu0 0
  %519 = vmatprep.mubr.bf16.mxu0 0
  %520 = vmatmul.mubr.bf16.gmra.mrb[0].mxu0 %v485
  %v521 = vpop.f32.mrb[0].mxu0
  %v522 = vadd.f32 0.0, %v521
  %v523 = vpop.f32.mrb[0].mxu0
  %v524 = vpop.f32.mrb[0].mxu0
  %v525 = vpop.f32.mrb[0].mxu0
  %526 = vdwg.mxu0
  %528 = vrot.lane.b32.xlu0 %v337, 96
  %v529 = vpop.permute.xlu0 %528
  %531 = vxpose.xlu0.b32.start [1/16] %v529, 128
  %532 = vxpose.xlu0.b32.cont [2/16] 0.0, 128
  %533 = vxpose.xlu0.b32.cont [3/16] 0.0, 128
  %534 = vxpose.xlu0.b32.cont [4/16] 0.0, 128
  %535 = vxpose.xlu0.b32.cont [5/16] 0.0, 128
  %536 = vxpose.xlu0.b32.cont [6/16] 0.0, 128
  %537 = vxpose.xlu0.b32.cont [7/16] 0.0, 128
  %538 = vxpose.xlu0.b32.cont [8/16] 0.0, 128
  %539 = vxpose.xlu0.b32.cont [9/16] 0.0, 128
  %540 = vxpose.xlu0.b32.cont [10/16] 0.0, 128
  %541 = vxpose.xlu0.b32.cont [11/16] 0.0, 128
  %542 = vxpose.xlu0.b32.cont [12/16] 0.0, 128
  %543 = vxpose.xlu0.b32.cont [13/16] 0.0, 128
  %544 = vxpose.xlu0.b32.cont [14/16] 0.0, 128
  %545 = vxpose.xlu0.b32.cont [15/16] 0.0, 128
  %546 = vxpose.xlu0.b32.end [16/16] 0.0, 128
  %v547 = vpop.trf.xlu0
  %v548 = vpop.trf.xlu0
  %v549 = vpop.trf.xlu0
  %v550 = vpop.trf.xlu0
  %v551 = vpop.trf.xlu0
  %v552 = vpop.trf.xlu0
  %v553 = vpop.trf.xlu0
  %v554 = vpop.trf.xlu0
  %v555 = vpop.trf.xlu0
  %v556 = vpop.trf.xlu0
  %v557 = vpop.trf.xlu0
  %v558 = vpop.trf.xlu0
  %v559 = vpop.trf.xlu0
  %v560 = vpop.trf.xlu0
  %v561 = vpop.trf.xlu0
  %v562 = vpop.trf.xlu0
  %563 = vrot.lane.b32.xlu0 %v337, 64
  %v564 = vpop.permute.xlu0 %563
  %v567 = vsel %vm379, %v547, 0
  %v570 = vsel %vm379, %v548, 0
  %v573 = vsel %vm379, %v549, 0
  %v576 = vsel %vm379, %v550, 0
  %578 = vmatprep.subr.mxu0 0.0
  %579 = vmatpush1.msra.mxu0 %v564
  %580 = vmatprep.subr.mxu0 0.0
  %581 = vmatpush1.msra.mxu0 0.0
  %582 = vmatprep.subr.mxu0 0.0
  %583 = vmatpush1.msra.mxu0 0.0
  %584 = vmatprep.subr.mxu0 0.0
  %585 = vmatpush1.msra.mxu0 0.0
  %586 = vmatprep.subr.mxu0 0.0
  %587 = vmatpush1.msra.mxu0 0.0
  %588 = vmatprep.subr.mxu0 0.0
  %589 = vmatpush1.msra.mxu0 0.0
  %590 = vmatprep.subr.mxu0 0.0
  %591 = vmatpush1.msra.mxu0 0.0
  %592 = vmatprep.subr.mxu0 0.0
  %593 = vmatpush1.msra.mxu0 0.0
  %594 = vmatprep.subr.mxu0 0.0
  %595 = vmatpush1.msra.mxu0 0.0
  %596 = vmatprep.subr.mxu0 0.0
  %597 = vmatpush1.msra.mxu0 0.0
  %598 = vmatprep.subr.mxu0 0.0
  %599 = vmatpush1.msra.mxu0 0.0
  %600 = vmatprep.subr.mxu0 0.0
  %601 = vmatpush1.msra.mxu0 0.0
  %602 = vmatprep.subr.mxu0 0.0
  %603 = vmatpush1.msra.mxu0 0.0
  %604 = vmatprep.subr.mxu0 0.0
  %605 = vmatpush1.msra.mxu0 0.0
  %606 = vmatprep.subr.mxu0 0.0
  %607 = vmatpush1.msra.mxu0 0.0
  %608 = vmatprep.subr.mxu0 0.0
  %609 = vmatpush1.msra.mxu0 0.0
  %610 = vmatprep.subr.mxu0 0.0
  %611 = vmatpush1.msra.mxu0 0.0
  %612 = vmatprep.subr.mxu0 0.0
  %613 = vmatpush1.msra.mxu0 0.0
  %614 = vmatprep.subr.mxu0 0.0
  %615 = vmatpush1.msra.mxu0 0.0
  %616 = vmatprep.subr.mxu0 0.0
  %617 = vmatpush1.msra.mxu0 0.0
  %618 = vmatprep.subr.mxu0 0.0
  %619 = vmatpush1.msra.mxu0 0.0
  %620 = vmatprep.subr.mxu0 0.0
  %621 = vmatpush1.msra.mxu0 0.0
  %622 = vmatprep.subr.mxu0 0.0
  %623 = vmatpush1.msra.mxu0 0.0
  %624 = vmatprep.subr.mxu0 0.0
  %625 = vmatpush1.msra.mxu0 0.0
  %626 = vmatprep.subr.mxu0 0.0
  %627 = vmatpush1.msra.mxu0 0.0
  %628 = vmatprep.subr.mxu0 0.0
  %629 = vmatpush1.msra.mxu0 0.0
  %630 = vmatprep.subr.mxu0 0.0
  %631 = vmatpush1.msra.mxu0 0.0
  %632 = vmatprep.subr.mxu0 0.0
  %633 = vmatpush1.msra.mxu0 0.0
  %634 = vmatprep.subr.mxu0 0.0
  %635 = vmatpush1.msra.mxu0 0.0
  %636 = vmatprep.subr.mxu0 0.0
  %637 = vmatpush1.msra.mxu0 0.0
  %638 = vmatprep.subr.mxu0 0.0
  %639 = vmatpush1.msra.mxu0 0.0
  %640 = vmatprep.subr.mxu0 0.0
  %641 = vmatpush1.msra.mxu0 0.0
  %642 = vmatprep.mubr.f32.mxu0 0.0
  %643 = vmatmul.mubr.f32.gmra.mrb[0].mxu0 %v567
  %v644 = vpop.f32.mrb[0].mxu0
  %v645 = vadd.f32 0.0, %v644
  %v646 = vpop.f32.mrb[0].mxu0
  %647 = vmatprep.mubr.f32.mxu0 0.0
  %648 = vmatmul.mubr.f32.gmra.mrb[0].mxu0 %v570
  %v649 = vpop.f32.mrb[0].mxu0
  %v650 = vadd.f32 0.0, %v649
  %v651 = vpop.f32.mrb[0].mxu0
  %652 = vmatprep.mubr.f32.mxu0 0.0
  %653 = vmatmul.mubr.f32.gmra.mrb[0].mxu0 %v573
  %v654 = vpop.f32.mrb[0].mxu0
  %v655 = vadd.f32 0.0, %v654
  %v656 = vpop.f32.mrb[0].mxu0
  %657 = vmatprep.mubr.f32.mxu0 0.0
  %658 = vmatmul.mubr.f32.gmra.mrb[0].mxu0 %v576
  %v659 = vpop.f32.mrb[0].mxu0
  %v660 = vadd.f32 0.0, %v659
  %v661 = vpop.f32.mrb[0].mxu0
  %662 = vdwg.mxu0
  %v663 = vmul.f32 %v645, %v217
  %v664 = vmul.f32 %v650, %v218
  %v665 = vmul.f32 %v655, %v219
  %v666 = vmul.f32 %v660, %v220
  %v667 = vpack.c.bf16 %v337, %v337
  %v668 = vpack.c.bf16 %v664, %v663
  %v669 = vpack.c.bf16 %v666, %v665
  %v671 = vsel %vm223, %v667, 0
  %673 = vmatprep.subr.bf16.mxu0 0
  %674 = vmatpush1.bf16.msra.mxu0 %v668
  %675 = vmatprep.subr.bf16.mxu0 0
  %676 = vmatpush1.bf16.msra.mxu0 %v669
  %677 = vmatprep.subr.bf16.mxu0 0
  %678 = vmatpush1.bf16.msra.mxu0 0
  %679 = vmatprep.subr.bf16.mxu0 0
  %680 = vmatpush1.bf16.msra.mxu0 0
  %681 = vmatprep.subr.bf16.mxu0 0
  %682 = vmatpush1.bf16.msra.mxu0 0
  %683 = vmatprep.subr.bf16.mxu0 0
  %684 = vmatpush1.bf16.msra.mxu0 0
  %685 = vmatprep.subr.bf16.mxu0 0
  %686 = vmatpush1.bf16.msra.mxu0 0
  %687 = vmatprep.subr.bf16.mxu0 0
  %688 = vmatpush1.bf16.msra.mxu0 0
  %689 = vmatprep.subr.bf16.mxu0 0
  %690 = vmatpush1.bf16.msra.mxu0 0
  %691 = vmatprep.subr.bf16.mxu0 0
  %692 = vmatpush1.bf16.msra.mxu0 0
  %693 = vmatprep.subr.bf16.mxu0 0
  %694 = vmatpush1.bf16.msra.mxu0 0
  %695 = vmatprep.subr.bf16.mxu0 0
  %696 = vmatpush1.bf16.msra.mxu0 0
  %697 = vmatprep.subr.bf16.mxu0 0
  %698 = vmatpush1.bf16.msra.mxu0 0
  %699 = vmatprep.subr.bf16.mxu0 0
  %700 = vmatpush1.bf16.msra.mxu0 0
  %701 = vmatprep.subr.bf16.mxu0 0
  %702 = vmatpush1.bf16.msra.mxu0 0
  %703 = vmatprep.subr.bf16.mxu0 0
  %704 = vmatpush1.bf16.msra.mxu0 0
  %705 = vmatprep.mubr.bf16.mxu0 0
  %706 = vmatmul.mubr.bf16.gmra.mrb[0].mxu0 %v671
  %v707 = vpop.f32.mrb[0].mxu0
  %v708 = vadd.f32 0.0, %v707
  %v709 = vpop.f32.mrb[0].mxu0
  %v710 = vpop.f32.mrb[0].mxu0
  %v711 = vpop.f32.mrb[0].mxu0
  %712 = vdwg.mxu0
  %v713 = vld [vmem:[%s8] sm:$0xf]
  %v714 = vld [vmem:[%s8 + $0x4] sm:$0xf]
  %v715 = vld [vmem:[%s8 + $0x8] sm:$0xf]
  %v716 = vld [vmem:[%s8 + $0xc] sm:$0xf]
  %v717 = vpack.c.bf16 %v708, %v522
  %v722 = vunpack.c.l.b16 %v713
  %v723 = vunpack.c.l.b16 %v714
  %v724 = vunpack.c.l.b16 %v715
  %v725 = vunpack.c.l.b16 %v716
  %v726 = vpack.c.b16 %v723, %v722
  %v727 = vpack.c.b16 %v725, %v724
  %v731 = vsel %vm223, %v717, 0
  %733 = vmatprep.subr.bf16.mxu0 0
  %734 = vmatpush1.bf16.msra.mxu0 %v726
  %735 = vmatprep.subr.bf16.mxu0 0
  %736 = vmatpush1.bf16.msra.mxu0 %v727
  %737 = vmatprep.subr.bf16.mxu0 0
  %738 = vmatpush1.bf16.msra.mxu0 0
  %739 = vmatprep.subr.bf16.mxu0 0
  %740 = vmatpush1.bf16.msra.mxu0 0
  %741 = vmatprep.subr.bf16.mxu0 0
  %742 = vmatpush1.bf16.msra.mxu0 0
  %743 = vmatprep.subr.bf16.mxu0 0
  %744 = vmatpush1.bf16.msra.mxu0 0
  %745 = vmatprep.subr.bf16.mxu0 0
  %746 = vmatpush1.bf16.msra.mxu0 0
  %747 = vmatprep.subr.bf16.mxu0 0
  %748 = vmatpush1.bf16.msra.mxu0 0
  %749 = vmatprep.subr.bf16.mxu0 0
  %750 = vmatpush1.bf16.msra.mxu0 0
  %751 = vmatprep.subr.bf16.mxu0 0
  %752 = vmatpush1.bf16.msra.mxu0 0
  %753 = vmatprep.subr.bf16.mxu0 0
  %754 = vmatpush1.bf16.msra.mxu0 0
  %755 = vmatprep.subr.bf16.mxu0 0
  %756 = vmatpush1.bf16.msra.mxu0 0
  %757 = vmatprep.subr.bf16.mxu0 0
  %758 = vmatpush1.bf16.msra.mxu0 0
  %759 = vmatprep.subr.bf16.mxu0 0
  %760 = vmatpush1.bf16.msra.mxu0 0
  %761 = vmatprep.subr.bf16.mxu0 0
  %762 = vmatpush1.bf16.msra.mxu0 0
  %763 = vmatprep.subr.bf16.mxu0 0
  %764 = vmatpush1.bf16.msra.mxu0 0
  %765 = vmatprep.mubr.bf16.mxu0 0
  %766 = vmatmul.mubr.bf16.gmra.mrb[0].mxu0 %v731
  %v767 = vpop.f32.mrb[0].mxu0
  %v768 = vadd.f32 0.0, %v767
  %v769 = vpop.f32.mrb[0].mxu0
  %v770 = vpop.f32.mrb[0].mxu0
  %v771 = vadd.f32 0.0, %v770
  %v772 = vpop.f32.mrb[0].mxu0
  %773 = vdwg.mxu0
  %v774 = vadd.f32 %v209, %v768
  %v775 = vadd.f32 %v212, %v771
  %v776 = vld [vmem:[%s9] sm:$0x1]
  %v778 = vlaneseq
  %v779 = vshrl.u32 %v778, 7
  %v780 = vsub.s32 0, %v779
  %v781 = vrot.slane %v776, %v780
  %v783 = vadd.f32 %v774, %v781
  %v784 = vadd.f32 %v775, %v781
  %v785 = vld [vmem:[%s10] sm:$0x1]
  %v786 = vld [vmem:[%s11] sm:$0x1]
  %v787 = vsel %vm223, %v783, 0.0
  %788 = vadd.xlane.f32.xlu0 %v787
  %v789 = vpop.xlane.xlu0 %788
  %v790 = vsel %vm223, %v784, 0.0
  %791 = vadd.xlane.f32.xlu0 %v790
  %v792 = vpop.xlane.xlu0 %791
  %v793 = vmul.f32 %v789, %v230
  %v794 = vmul.f32 %v792, %v230
  %v795 = vsub.f32 %v783, %v793
  %v796 = vsub.f32 %v784, %v794
  %v797 = vmul.f32 %v795, %v795
  %v798 = vmul.f32 %v796, %v796
  %v799 = vsel %vm223, %v797, 0.0
  %800 = vadd.xlane.f32.xlu0 %v799
  %v801 = vpop.xlane.xlu0 %800
  %v802 = vsel %vm223, %v798, 0.0
  %803 = vadd.xlane.f32.xlu0 %v802
  %v804 = vpop.xlane.xlu0 %803
  %v805 = vmul.f32 %v801, %v230
  %v806 = vmul.f32 %v804, %v230
  %v807 = vadd.f32 %v805, 1e-05
  %v808 = vadd.f32 %v806, 1e-05
  %v809 = vrsqrt.pop %v807
  %v810 = vrsqrt.pop %v808
  %v811 = vmul.f32 %v795, %v809
  %v812 = vmul.f32 %v796, %v810
  %v814 = vlaneseq
  %v815 = vshrl.u32 %v814, 7
  %v816 = vsub.s32 0, %v815
  %v817 = vrot.slane %v785, %v816
  %v819 = vmul.f32 %v811, %v817
  %v820 = vmul.f32 %v812, %v817
  %v822 = vlaneseq
  %v823 = vshrl.u32 %v822, 7
  %v824 = vsub.s32 0, %v823
  %v825 = vrot.slane %v786, %v824
  %v827 = vadd.f32 %v819, %v825
  %v828 = vadd.f32 %v820, %v825
  %v829 = vld [vmem:[%s12] sm:$0xf]
  %v830 = vld [vmem:[%s12 + $0x4] sm:$0xf]
  %v831 = vld [vmem:[%s12 + $0x8] sm:$0xf]
  %v832 = vld [vmem:[%s12 + $0xc] sm:$0xf]
  %v833 = vpack.c.bf16 %v828, %v827
  %v834 = vld [vmem:[%s13] sm:$0x1]
  %v836 = vlaneseq
  %v837 = vshrl.u32 %v836, 7
  %v838 = vsub.s32 0, %v837
  %v839 = vrot.slane %v834, %v838
  %v845 = vunpack.c.l.b16 %v829
  %v846 = vunpack.c.l.b16 %v830
  %v847 = vunpack.c.l.b16 %v831
  %v848 = vunpack.c.l.b16 %v832
  %v849 = vpack.c.b16 %v846, %v845
  %v850 = vpack.c.b16 %v848, %v847
  %v854 = vsel %vm223, %v833, 0
  %856 = vmatprep.subr.bf16.mxu0 0
  %857 = vmatpush1.bf16.msra.mxu0 %v849
  %858 = vmatprep.subr.bf16.mxu0 0
  %859 = vmatpush1.bf16.msra.mxu0 %v850
  %860 = vmatprep.subr.bf16.mxu0 0
  %861 = vmatpush1.bf16.msra.mxu0 0
  %862 = vmatprep.subr.bf16.mxu0 0
  %863 = vmatpush1.bf16.msra.mxu0 0
  %864 = vmatprep.subr.bf16.mxu0 0
  %865 = vmatpush1.bf16.msra.mxu0 0
  %866 = vmatprep.subr.bf16.mxu0 0
  %867 = vmatpush1.bf16.msra.mxu0 0
  %868 = vmatprep.subr.bf16.mxu0 0
  %869 = vmatpush1.bf16.msra.mxu0 0
  %870 = vmatprep.subr.bf16.mxu0 0
  %871 = vmatpush1.bf16.msra.mxu0 0
  %872 = vmatprep.subr.bf16.mxu0 0
  %873 = vmatpush1.bf16.msra.mxu0 0
  %874 = vmatprep.subr.bf16.mxu0 0
  %875 = vmatpush1.bf16.msra.mxu0 0
  %876 = vmatprep.subr.bf16.mxu0 0
  %877 = vmatpush1.bf16.msra.mxu0 0
  %878 = vmatprep.subr.bf16.mxu0 0
  %879 = vmatpush1.bf16.msra.mxu0 0
  %880 = vmatprep.subr.bf16.mxu0 0
  %881 = vmatpush1.bf16.msra.mxu0 0
  %882 = vmatprep.subr.bf16.mxu0 0
  %883 = vmatpush1.bf16.msra.mxu0 0
  %884 = vmatprep.subr.bf16.mxu0 0
  %885 = vmatpush1.bf16.msra.mxu0 0
  %886 = vmatprep.subr.bf16.mxu0 0
  %887 = vmatpush1.bf16.msra.mxu0 0
  %888 = vmatprep.mubr.bf16.mxu0 0
  %889 = vmatmul.mubr.bf16.gmra.mrb[0].mxu0 %v854
  %v890 = vpop.f32.mrb[0].mxu0
  %v891 = vadd.f32 %v839, %v890
  %v892 = vpop.f32.mrb[0].mxu0
  %v893 = vpop.f32.mrb[0].mxu0
  %v894 = vadd.f32 %v839, %v893
  %v895 = vpop.f32.mrb[0].mxu0
  %896 = vdwg.mxu0
  %v897 = vmul.f32 %v891, 0.5
  %v898 = vmul.f32 %v894, 0.5
  %v899 = vmul.f32 %v891, 0.70710677
  %v900 = vmul.f32 %v894, 0.70710677
  %vm901 = vcmp.ge.f32.partialorder %v899, 0.0
  %vm902 = vcmp.ge.f32.partialorder %v900, 0.0
  %v903 = vsel %vm901, 1.0, -1.0
  %v904 = vsel %vm902, 1.0, -1.0
  %v905 = vand.u32 2147483647, %v899
  %v906 = vand.u32 2147483647, %v900
  %v907 = vmul.f32 %v905, 0.3275911
  %v908 = vmul.f32 %v906, 0.3275911
  %v909 = vadd.f32 %v907, 1.0
  %v910 = vadd.f32 %v908, 1.0
  %v911 = vrcp.pop %v909
  %v912 = vmul.f32 1.0, %v911
  %v913 = vrcp.pop %v910
  %v914 = vmul.f32 1.0, %v913
  %v915 = vmul.f32 %v912, 1.0614054
  %v916 = vmul.f32 %v914, 1.0614054
  %v917 = vadd.f32 %v915, -1.4531521
  %v918 = vadd.f32 %v916, -1.4531521
  %v919 = vmul.f32 %v917, %v912
  %v920 = vmul.f32 %v918, %v914
  %v921 = vadd.f32 %v919, 1.4214138
  %v922 = vadd.f32 %v920, 1.4214138
  %v923 = vmul.f32 %v921, %v912
  %v924 = vmul.f32 %v922, %v914
  %v925 = vadd.f32 %v923, -0.28449672
  %v926 = vadd.f32 %v924, -0.28449672
  %v927 = vmul.f32 %v925, %v912
  %v928 = vmul.f32 %v926, %v914
  %v929 = vadd.f32 %v927, 0.2548296
  %v930 = vadd.f32 %v928, 0.2548296
  %v931 = vmul.f32 %v929, %v912
  %v932 = vmul.f32 %v930, %v914
  %v933 = vsub.f32 0.0, %v905
  %v934 = vsub.f32 0.0, %v906
  %v935 = vmul.f32 %v933, %v905
  %v936 = vmul.f32 %v934, %v906
  %v937 = vmul.f32 %v935, 1.442695
  %v938 = vpow.pop %v937
  %v939 = vmul.f32 %v936, 1.442695
  %v940 = vpow.pop %v939
  %v941 = vmul.f32 %v931, %v938
  %v942 = vmul.f32 %v932, %v940
  %v943 = vsub.f32 1.0, %v941
  %v944 = vsub.f32 1.0, %v942
  %v945 = vmul.f32 %v903, %v943
  %v946 = vmul.f32 %v904, %v944
  %v947 = vadd.f32 %v945, 1.0
  %v948 = vadd.f32 %v946, 1.0
  %v949 = vmul.f32 %v897, %v947
  %v950 = vmul.f32 %v898, %v948
  %v951 = vld [vmem:[%s14] sm:$0xf]
  %v952 = vld [vmem:[%s14 + $0x4] sm:$0xf]
  %v953 = vld [vmem:[%s14 + $0x8] sm:$0xf]
  %v954 = vld [vmem:[%s14 + $0xc] sm:$0xf]
  %v955 = vld [vmem:[%s14 + $0x10] sm:$0xf]
  %v956 = vld [vmem:[%s14 + $0x14] sm:$0xf]
  %v957 = vld [vmem:[%s14 + $0x18] sm:$0xf]
  %v958 = vld [vmem:[%s14 + $0x1c] sm:$0xf]
  %v959 = vld [vmem:[%s14 + $0x20] sm:$0xf]
  %v960 = vld [vmem:[%s14 + $0x24] sm:$0xf]
  %v961 = vld [vmem:[%s14 + $0x28] sm:$0xf]
  %v962 = vld [vmem:[%s14 + $0x2c] sm:$0xf]
  %v963 = vld [vmem:[%s14 + $0x30] sm:$0xf]
  %v964 = vld [vmem:[%s14 + $0x34] sm:$0xf]
  %v965 = vld [vmem:[%s14 + $0x38] sm:$0xf]
  %v966 = vld [vmem:[%s14 + $0x3c] sm:$0xf]
  %v967 = vpack.c.bf16 %v950, %v949
  %v984 = vunpack.c.l.b16 %v951
  %v985 = vunpack.c.l.b16 %v952
  %v986 = vunpack.c.l.b16 %v953
  %v987 = vunpack.c.l.b16 %v954
  %v988 = vunpack.c.l.b16 %v955
  %v989 = vunpack.c.l.b16 %v956
  %v990 = vunpack.c.l.b16 %v957
  %v991 = vunpack.c.l.b16 %v958
  %v992 = vunpack.c.l.b16 %v959
  %v993 = vunpack.c.l.b16 %v960
  %v994 = vunpack.c.l.b16 %v961
  %v995 = vunpack.c.l.b16 %v962
  %v996 = vunpack.c.l.b16 %v963
  %v997 = vunpack.c.l.b16 %v964
  %v998 = vunpack.c.l.b16 %v965
  %v999 = vunpack.c.l.b16 %v966
  %v1000 = vpack.c.b16 %v985, %v984
  %v1001 = vpack.c.b16 %v987, %v986
  %v1002 = vpack.c.b16 %v989, %v988
  %v1003 = vpack.c.b16 %v991, %v990
  %v1004 = vpack.c.b16 %v993, %v992
  %v1005 = vpack.c.b16 %v995, %v994
  %v1006 = vpack.c.b16 %v997, %v996
  %v1007 = vpack.c.b16 %v999, %v998
  %1016 = vmatprep.subr.bf16.mxu0 0
  %1017 = vmatpush1.bf16.msra.mxu0 %v1000
  %1018 = vmatprep.subr.bf16.mxu0 0
  %1019 = vmatpush1.bf16.msra.mxu0 %v1001
  %1020 = vmatprep.subr.bf16.mxu0 0
  %1021 = vmatpush1.bf16.msra.mxu0 %v1002
  %1022 = vmatprep.subr.bf16.mxu0 0
  %1023 = vmatpush1.bf16.msra.mxu0 %v1003
  %1024 = vmatprep.subr.bf16.mxu0 0
  %1025 = vmatpush1.bf16.msra.mxu0 %v1004
  %1026 = vmatprep.subr.bf16.mxu0 0
  %1027 = vmatpush1.bf16.msra.mxu0 %v1005
  %1028 = vmatprep.subr.bf16.mxu0 0
  %1029 = vmatpush1.bf16.msra.mxu0 %v1006
  %1030 = vmatprep.subr.bf16.mxu0 0
  %1031 = vmatpush1.bf16.msra.mxu0 %v1007
  %1032 = vmatprep.subr.bf16.mxu0 0
  %1033 = vmatpush1.bf16.msra.mxu0 0
  %1034 = vmatprep.subr.bf16.mxu0 0
  %1035 = vmatpush1.bf16.msra.mxu0 0
  %1036 = vmatprep.subr.bf16.mxu0 0
  %1037 = vmatpush1.bf16.msra.mxu0 0
  %1038 = vmatprep.subr.bf16.mxu0 0
  %1039 = vmatpush1.bf16.msra.mxu0 0
  %1040 = vmatprep.subr.bf16.mxu0 0
  %1041 = vmatpush1.bf16.msra.mxu0 0
  %1042 = vmatprep.subr.bf16.mxu0 0
  %1043 = vmatpush1.bf16.msra.mxu0 0
  %1044 = vmatprep.subr.bf16.mxu0 0
  %1045 = vmatpush1.bf16.msra.mxu0 0
  %1046 = vmatprep.subr.bf16.mxu0 0
  %1047 = vmatpush1.bf16.msra.mxu0 0
  %1048 = vmatprep.mubr.bf16.mxu0 0
  %1049 = vmatmul.mubr.bf16.gmra.mrb[0].mxu0 %v967
  %v1050 = vpop.f32.mrb[0].mxu0
  %v1051 = vadd.f32 0.0, %v1050
  %v1052 = vpop.f32.mrb[0].mxu0
  %v1053 = vpop.f32.mrb[0].mxu0
  %v1054 = vadd.f32 0.0, %v1053
  %v1055 = vpop.f32.mrb[0].mxu0
  %1056 = vdwg.mxu0
  %v1057 = vadd.f32 %v783, %v1051
  %v1058 = vadd.f32 %v784, %v1054
  %v1059 = vld [vmem:[%s15] sm:$0x1]
  %v1061 = vlaneseq
  %v1062 = vshrl.u32 %v1061, 7
  %v1063 = vsub.s32 0, %v1062
  %v1064 = vrot.slane %v1059, %v1063
  %v1066 = vadd.f32 %v1057, %v1064
  %v1067 = vadd.f32 %v1058, %v1064
  %s1068 = scalar_lea.vmem %s5, 1
  %v1069 = vld [vmem:[%s1068] sm:$0x1]
  %s1070 = scalar_lea.vmem %s6, 1
  %v1071 = vld [vmem:[%s1070] sm:$0x1]
  %v1072 = vsel %vm223, %v1066, 0.0
  %1073 = vadd.xlane.f32.xlu0 %v1072
  %v1074 = vpop.xlane.xlu0 %1073
  %v1075 = vsel %vm223, %v1067, 0.0
  %1076 = vadd.xlane.f32.xlu0 %v1075
  %v1077 = vpop.xlane.xlu0 %1076
  %v1078 = vmul.f32 %v1074, %v230
  %v1079 = vmul.f32 %v1077, %v230
  %v1080 = vsub.f32 %v1066, %v1078
  %v1081 = vsub.f32 %v1067, %v1079
  %v1082 = vmul.f32 %v1080, %v1080
  %v1083 = vmul.f32 %v1081, %v1081
  %v1084 = vsel %vm223, %v1082, 0.0
  %1085 = vadd.xlane.f32.xlu0 %v1084
  %v1086 = vpop.xlane.xlu0 %1085
  %v1087 = vsel %vm223, %v1083, 0.0
  %1088 = vadd.xlane.f32.xlu0 %v1087
  %v1089 = vpop.xlane.xlu0 %1088
  %v1090 = vmul.f32 %v1086, %v230
  %v1091 = vmul.f32 %v1089, %v230
  %v1092 = vadd.f32 %v1090, 1e-05
  %v1093 = vadd.f32 %v1091, 1e-05
  %v1094 = vrsqrt.pop %v1092
  %v1095 = vrsqrt.pop %v1093
  %v1096 = vmul.f32 %v1080, %v1094
  %v1097 = vmul.f32 %v1081, %v1095
  %v1099 = vlaneseq
  %v1100 = vshrl.u32 %v1099, 7
  %v1101 = vsub.s32 0, %v1100
  %v1102 = vrot.slane %v1069, %v1101
  %v1104 = vmul.f32 %v1096, %v1102
  %v1105 = vmul.f32 %v1097, %v1102
  %v1107 = vlaneseq
  %v1108 = vshrl.u32 %v1107, 7
  %v1109 = vsub.s32 0, %v1108
  %v1110 = vrot.slane %v1071, %v1109
  %v1112 = vadd.f32 %v1104, %v1110
  %v1113 = vadd.f32 %v1105, %v1110
  %v1114 = vmul.f32 %v1112, %v270
  %v1115 = vmul.f32 %v1113, %v275
  %s1116 = scalar_lea.vmem %s7, 16
  %v1117 = vld [vmem:[%s1116] sm:$0xf]
  %v1118 = vld [vmem:[%s1116 + $0x4] sm:$0xf]
  %v1119 = vld [vmem:[%s1116 + $0x8] sm:$0xf]
  %v1120 = vld [vmem:[%s1116 + $0xc] sm:$0xf]
  %v1121 = vpack.c.bf16 %v1115, %v1114
  %v1126 = vunpack.c.l.b16 %v1117
  %v1127 = vunpack.c.l.b16 %v1118
  %v1128 = vunpack.c.l.b16 %v1119
  %v1129 = vunpack.c.l.b16 %v1120
  %v1130 = vpack.c.b16 %v1127, %v1126
  %v1131 = vpack.c.b16 %v1129, %v1128
  %v1135 = vsel %vm223, %v1121, 0
  %1137 = vmatprep.subr.bf16.mxu0 0
  %1138 = vmatpush1.bf16.msra.mxu0 %v1130
  %1139 = vmatprep.subr.bf16.mxu0 0
  %1140 = vmatpush1.bf16.msra.mxu0 %v1131
  %1141 = vmatprep.subr.bf16.mxu0 0
  %1142 = vmatpush1.bf16.msra.mxu0 0
  %1143 = vmatprep.subr.bf16.mxu0 0
  %1144 = vmatpush1.bf16.msra.mxu0 0
  %1145 = vmatprep.subr.bf16.mxu0 0
  %1146 = vmatpush1.bf16.msra.mxu0 0
  %1147 = vmatprep.subr.bf16.mxu0 0
  %1148 = vmatpush1.bf16.msra.mxu0 0
  %1149 = vmatprep.subr.bf16.mxu0 0
  %1150 = vmatpush1.bf16.msra.mxu0 0
  %1151 = vmatprep.subr.bf16.mxu0 0
  %1152 = vmatpush1.bf16.msra.mxu0 0
  %1153 = vmatprep.subr.bf16.mxu0 0
  %1154 = vmatpush1.bf16.msra.mxu0 0
  %1155 = vmatprep.subr.bf16.mxu0 0
  %1156 = vmatpush1.bf16.msra.mxu0 0
  %1157 = vmatprep.subr.bf16.mxu0 0
  %1158 = vmatpush1.bf16.msra.mxu0 0
  %1159 = vmatprep.subr.bf16.mxu0 0
  %1160 = vmatpush1.bf16.msra.mxu0 0
  %1161 = vmatprep.subr.bf16.mxu0 0
  %1162 = vmatpush1.bf16.msra.mxu0 0
  %1163 = vmatprep.subr.bf16.mxu0 0
  %1164 = vmatpush1.bf16.msra.mxu0 0
  %1165 = vmatprep.subr.bf16.mxu0 0
  %1166 = vmatpush1.bf16.msra.mxu0 0
  %1167 = vmatprep.subr.bf16.mxu0 0
  %1168 = vmatpush1.bf16.msra.mxu0 0
  %1169 = vmatprep.mubr.bf16.mxu0 0
  %1170 = vmatmul.mubr.bf16.gmra.mrb[0].mxu0 %v1135
  %v1171 = vpop.f32.mrb[0].mxu0
  %v1172 = vadd.f32 0.0, %v1171
  %v1173 = vpop.f32.mrb[0].mxu0
  %v1174 = vpop.f32.mrb[0].mxu0
  %v1175 = vadd.f32 0.0, %v1174
  %v1176 = vpop.f32.mrb[0].mxu0
  %1177 = vdwg.mxu0
  %1179 = vrot.lane.b32.xlu0 %v1172, 96
  %v1180 = vpop.permute.xlu0 %1179
  %1182 = vxpose.xlu0.b32.start [1/16] %v1180, 128
  %1183 = vxpose.xlu0.b32.cont [2/16] 0.0, 128
  %1184 = vxpose.xlu0.b32.cont [3/16] 0.0, 128
  %1185 = vxpose.xlu0.b32.cont [4/16] 0.0, 128
  %1186 = vxpose.xlu0.b32.cont [5/16] 0.0, 128
  %1187 = vxpose.xlu0.b32.cont [6/16] 0.0, 128
  %1188 = vxpose.xlu0.b32.cont [7/16] 0.0, 128
  %1189 = vxpose.xlu0.b32.cont [8/16] 0.0, 128
  %1190 = vxpose.xlu0.b32.cont [9/16] 0.0, 128
  %1191 = vxpose.xlu0.b32.cont [10/16] 0.0, 128
  %1192 = vxpose.xlu0.b32.cont [11/16] 0.0, 128
  %1193 = vxpose.xlu0.b32.cont [12/16] 0.0, 128
  %1194 = vxpose.xlu0.b32.cont [13/16] 0.0, 128
  %1195 = vxpose.xlu0.b32.cont [14/16] 0.0, 128
  %1196 = vxpose.xlu0.b32.cont [15/16] 0.0, 128
  %1197 = vxpose.xlu0.b32.end [16/16] 0.0, 128
  %v1198 = vpop.trf.xlu0
  %v1199 = vpop.trf.xlu0
  %v1200 = vpop.trf.xlu0
  %v1201 = vpop.trf.xlu0
  %v1202 = vpop.trf.xlu0
  %v1203 = vpop.trf.xlu0
  %v1204 = vpop.trf.xlu0
  %v1205 = vpop.trf.xlu0
  %v1206 = vpop.trf.xlu0
  %v1207 = vpop.trf.xlu0
  %v1208 = vpop.trf.xlu0
  %v1209 = vpop.trf.xlu0
  %v1210 = vpop.trf.xlu0
  %v1211 = vpop.trf.xlu0
  %v1212 = vpop.trf.xlu0
  %v1213 = vpop.trf.xlu0
  %1214 = vrot.lane.b32.xlu0 %v1172, 64
  %v1215 = vpop.permute.xlu0 %1214
  %v1218 = vsel %vm379, %v1198, 0
  %v1221 = vsel %vm379, %v1199, 0
  %v1224 = vsel %vm379, %v1200, 0
  %v1227 = vsel %vm379, %v1201, 0
  %1229 = vmatprep.subr.mxu0 0.0
  %1230 = vmatpush1.msra.mxu0 %v1215
  %1231 = vmatprep.subr.mxu0 0.0
  %1232 = vmatpush1.msra.mxu0 0.0
  %1233 = vmatprep.subr.mxu0 0.0
  %1234 = vmatpush1.msra.mxu0 0.0
  %1235 = vmatprep.subr.mxu0 0.0
  %1236 = vmatpush1.msra.mxu0 0.0
  %1237 = vmatprep.subr.mxu0 0.0
  %1238 = vmatpush1.msra.mxu0 0.0
  %1239 = vmatprep.subr.mxu0 0.0
  %1240 = vmatpush1.msra.mxu0 0.0
  %1241 = vmatprep.subr.mxu0 0.0
  %1242 = vmatpush1.msra.mxu0 0.0
  %1243 = vmatprep.subr.mxu0 0.0
  %1244 = vmatpush1.msra.mxu0 0.0
  %1245 = vmatprep.subr.mxu0 0.0
  %1246 = vmatpush1.msra.mxu0 0.0
  %1247 = vmatprep.subr.mxu0 0.0
  %1248 = vmatpush1.msra.mxu0 0.0
  %1249 = vmatprep.subr.mxu0 0.0
  %1250 = vmatpush1.msra.mxu0 0.0
  %1251 = vmatprep.subr.mxu0 0.0
  %1252 = vmatpush1.msra.mxu0 0.0
  %1253 = vmatprep.subr.mxu0 0.0
  %1254 = vmatpush1.msra.mxu0 0.0
  %1255 = vmatprep.subr.mxu0 0.0
  %1256 = vmatpush1.msra.mxu0 0.0
  %1257 = vmatprep.subr.mxu0 0.0
  %1258 = vmatpush1.msra.mxu0 0.0
  %1259 = vmatprep.subr.mxu0 0.0
  %1260 = vmatpush1.msra.mxu0 0.0
  %1261 = vmatprep.subr.mxu0 0.0
  %1262 = vmatpush1.msra.mxu0 0.0
  %1263 = vmatprep.subr.mxu0 0.0
  %1264 = vmatpush1.msra.mxu0 0.0
  %1265 = vmatprep.subr.mxu0 0.0
  %1266 = vmatpush1.msra.mxu0 0.0
  %1267 = vmatprep.subr.mxu0 0.0
  %1268 = vmatpush1.msra.mxu0 0.0
  %1269 = vmatprep.subr.mxu0 0.0
  %1270 = vmatpush1.msra.mxu0 0.0
  %1271 = vmatprep.subr.mxu0 0.0
  %1272 = vmatpush1.msra.mxu0 0.0
  %1273 = vmatprep.subr.mxu0 0.0
  %1274 = vmatpush1.msra.mxu0 0.0
  %1275 = vmatprep.subr.mxu0 0.0
  %1276 = vmatpush1.msra.mxu0 0.0
  %1277 = vmatprep.subr.mxu0 0.0
  %1278 = vmatpush1.msra.mxu0 0.0
  %1279 = vmatprep.subr.mxu0 0.0
  %1280 = vmatpush1.msra.mxu0 0.0
  %1281 = vmatprep.subr.mxu0 0.0
  %1282 = vmatpush1.msra.mxu0 0.0
  %1283 = vmatprep.subr.mxu0 0.0
  %1284 = vmatpush1.msra.mxu0 0.0
  %1285 = vmatprep.subr.mxu0 0.0
  %1286 = vmatpush1.msra.mxu0 0.0
  %1287 = vmatprep.subr.mxu0 0.0
  %1288 = vmatpush1.msra.mxu0 0.0
  %1289 = vmatprep.subr.mxu0 0.0
  %1290 = vmatpush1.msra.mxu0 0.0
  %1291 = vmatprep.subr.mxu0 0.0
  %1292 = vmatpush1.msra.mxu0 0.0
  %1293 = vmatprep.mubr.f32.mxu0 0.0
  %1294 = vmatmul.mubr.f32.gmra.mrb[0].mxu0 %v1218
  %v1295 = vpop.f32.mrb[0].mxu0
  %v1296 = vadd.f32 0.0, %v1295
  %v1297 = vpop.f32.mrb[0].mxu0
  %1298 = vmatprep.mubr.f32.mxu0 0.0
  %1299 = vmatmul.mubr.f32.gmra.mrb[0].mxu0 %v1221
  %v1300 = vpop.f32.mrb[0].mxu0
  %v1301 = vadd.f32 0.0, %v1300
  %v1302 = vpop.f32.mrb[0].mxu0
  %1303 = vmatprep.mubr.f32.mxu0 0.0
  %1304 = vmatmul.mubr.f32.gmra.mrb[0].mxu0 %v1224
  %v1305 = vpop.f32.mrb[0].mxu0
  %v1306 = vadd.f32 0.0, %v1305
  %v1307 = vpop.f32.mrb[0].mxu0
  %1308 = vmatprep.mubr.f32.mxu0 0.0
  %1309 = vmatmul.mubr.f32.gmra.mrb[0].mxu0 %v1227
  %v1310 = vpop.f32.mrb[0].mxu0
  %v1311 = vadd.f32 0.0, %v1310
  %v1312 = vpop.f32.mrb[0].mxu0
  %1313 = vdwg.mxu0
  %v1314 = vmul.f32 %v1296, %v217
  %v1315 = vmul.f32 %v1301, %v218
  %v1316 = vmul.f32 %v1306, %v219
  %v1317 = vmul.f32 %v1311, %v220
  %v1318 = vpack.c.bf16 %v1172, %v1172
  %v1319 = vpack.c.bf16 %v1315, %v1314
  %v1320 = vpack.c.bf16 %v1317, %v1316
  %v1322 = vsel %vm223, %v1318, 0
  %1324 = vmatprep.subr.bf16.mxu0 0
  %1325 = vmatpush1.bf16.msra.mxu0 %v1319
  %1326 = vmatprep.subr.bf16.mxu0 0
  %1327 = vmatpush1.bf16.msra.mxu0 %v1320
  %1328 = vmatprep.subr.bf16.mxu0 0
  %1329 = vmatpush1.bf16.msra.mxu0 0
  %1330 = vmatprep.subr.bf16.mxu0 0
  %1331 = vmatpush1.bf16.msra.mxu0 0
  %1332 = vmatprep.subr.bf16.mxu0 0
  %1333 = vmatpush1.bf16.msra.mxu0 0
  %1334 = vmatprep.subr.bf16.mxu0 0
  %1335 = vmatpush1.bf16.msra.mxu0 0
  %1336 = vmatprep.subr.bf16.mxu0 0
  %1337 = vmatpush1.bf16.msra.mxu0 0
  %1338 = vmatprep.subr.bf16.mxu0 0
  %1339 = vmatpush1.bf16.msra.mxu0 0
  %1340 = vmatprep.subr.bf16.mxu0 0
  %1341 = vmatpush1.bf16.msra.mxu0 0
  %1342 = vmatprep.subr.bf16.mxu0 0
  %1343 = vmatpush1.bf16.msra.mxu0 0
  %1344 = vmatprep.subr.bf16.mxu0 0
  %1345 = vmatpush1.bf16.msra.mxu0 0
  %1346 = vmatprep.subr.bf16.mxu0 0
  %1347 = vmatpush1.bf16.msra.mxu0 0
  %1348 = vmatprep.subr.bf16.mxu0 0
  %1349 = vmatpush1.bf16.msra.mxu0 0
  %1350 = vmatprep.subr.bf16.mxu0 0
  %1351 = vmatpush1.bf16.msra.mxu0 0
  %1352 = vmatprep.subr.bf16.mxu0 0
  %1353 = vmatpush1.bf16.msra.mxu0 0
  %1354 = vmatprep.subr.bf16.mxu0 0
  %1355 = vmatpush1.bf16.msra.mxu0 0
  %1356 = vmatprep.mubr.bf16.mxu0 0
  %1357 = vmatmul.mubr.bf16.gmra.mrb[0].mxu0 %v1322
  %v1358 = vpop.f32.mrb[0].mxu0
  %v1359 = vadd.f32 0.0, %v1358
  %v1360 = vpop.f32.mrb[0].mxu0
  %v1361 = vpop.f32.mrb[0].mxu0
  %v1362 = vpop.f32.mrb[0].mxu0
  %1363 = vdwg.mxu0
  %1365 = vrot.lane.b32.xlu0 %v1175, 96
  %v1366 = vpop.permute.xlu0 %1365
  %1368 = vxpose.xlu0.b32.start [1/16] %v1366, 128
  %1369 = vxpose.xlu0.b32.cont [2/16] 0.0, 128
  %1370 = vxpose.xlu0.b32.cont [3/16] 0.0, 128
  %1371 = vxpose.xlu0.b32.cont [4/16] 0.0, 128
  %1372 = vxpose.xlu0.b32.cont [5/16] 0.0, 128
  %1373 = vxpose.xlu0.b32.cont [6/16] 0.0, 128
  %1374 = vxpose.xlu0.b32.cont [7/16] 0.0, 128
  %1375 = vxpose.xlu0.b32.cont [8/16] 0.0, 128
  %1376 = vxpose.xlu0.b32.cont [9/16] 0.0, 128
  %1377 = vxpose.xlu0.b32.cont [10/16] 0.0, 128
  %1378 = vxpose.xlu0.b32.cont [11/16] 0.0, 128
  %1379 = vxpose.xlu0.b32.cont [12/16] 0.0, 128
  %1380 = vxpose.xlu0.b32.cont [13/16] 0.0, 128
  %1381 = vxpose.xlu0.b32.cont [14/16] 0.0, 128
  %1382 = vxpose.xlu0.b32.cont [15/16] 0.0, 128
  %1383 = vxpose.xlu0.b32.end [16/16] 0.0, 128
  %v1384 = vpop.trf.xlu0
  %v1385 = vpop.trf.xlu0
  %v1386 = vpop.trf.xlu0
  %v1387 = vpop.trf.xlu0
  %v1388 = vpop.trf.xlu0
  %v1389 = vpop.trf.xlu0
  %v1390 = vpop.trf.xlu0
  %v1391 = vpop.trf.xlu0
  %v1392 = vpop.trf.xlu0
  %v1393 = vpop.trf.xlu0
  %v1394 = vpop.trf.xlu0
  %v1395 = vpop.trf.xlu0
  %v1396 = vpop.trf.xlu0
  %v1397 = vpop.trf.xlu0
  %v1398 = vpop.trf.xlu0
  %v1399 = vpop.trf.xlu0
  %1400 = vrot.lane.b32.xlu0 %v1175, 64
  %v1401 = vpop.permute.xlu0 %1400
  %v1404 = vsel %vm379, %v1384, 0
  %v1407 = vsel %vm379, %v1385, 0
  %v1410 = vsel %vm379, %v1386, 0
  %v1413 = vsel %vm379, %v1387, 0
  %1415 = vmatprep.subr.mxu0 0.0
  %1416 = vmatpush1.msra.mxu0 %v1401
  %1417 = vmatprep.subr.mxu0 0.0
  %1418 = vmatpush1.msra.mxu0 0.0
  %1419 = vmatprep.subr.mxu0 0.0
  %1420 = vmatpush1.msra.mxu0 0.0
  %1421 = vmatprep.subr.mxu0 0.0
  %1422 = vmatpush1.msra.mxu0 0.0
  %1423 = vmatprep.subr.mxu0 0.0
  %1424 = vmatpush1.msra.mxu0 0.0
  %1425 = vmatprep.subr.mxu0 0.0
  %1426 = vmatpush1.msra.mxu0 0.0
  %1427 = vmatprep.subr.mxu0 0.0
  %1428 = vmatpush1.msra.mxu0 0.0
  %1429 = vmatprep.subr.mxu0 0.0
  %1430 = vmatpush1.msra.mxu0 0.0
  %1431 = vmatprep.subr.mxu0 0.0
  %1432 = vmatpush1.msra.mxu0 0.0
  %1433 = vmatprep.subr.mxu0 0.0
  %1434 = vmatpush1.msra.mxu0 0.0
  %1435 = vmatprep.subr.mxu0 0.0
  %1436 = vmatpush1.msra.mxu0 0.0
  %1437 = vmatprep.subr.mxu0 0.0
  %1438 = vmatpush1.msra.mxu0 0.0
  %1439 = vmatprep.subr.mxu0 0.0
  %1440 = vmatpush1.msra.mxu0 0.0
  %1441 = vmatprep.subr.mxu0 0.0
  %1442 = vmatpush1.msra.mxu0 0.0
  %1443 = vmatprep.subr.mxu0 0.0
  %1444 = vmatpush1.msra.mxu0 0.0
  %1445 = vmatprep.subr.mxu0 0.0
  %1446 = vmatpush1.msra.mxu0 0.0
  %1447 = vmatprep.subr.mxu0 0.0
  %1448 = vmatpush1.msra.mxu0 0.0
  %1449 = vmatprep.subr.mxu0 0.0
  %1450 = vmatpush1.msra.mxu0 0.0
  %1451 = vmatprep.subr.mxu0 0.0
  %1452 = vmatpush1.msra.mxu0 0.0
  %1453 = vmatprep.subr.mxu0 0.0
  %1454 = vmatpush1.msra.mxu0 0.0
  %1455 = vmatprep.subr.mxu0 0.0
  %1456 = vmatpush1.msra.mxu0 0.0
  %1457 = vmatprep.subr.mxu0 0.0
  %1458 = vmatpush1.msra.mxu0 0.0
  %1459 = vmatprep.subr.mxu0 0.0
  %1460 = vmatpush1.msra.mxu0 0.0
  %1461 = vmatprep.subr.mxu0 0.0
  %1462 = vmatpush1.msra.mxu0 0.0
  %1463 = vmatprep.subr.mxu0 0.0
  %1464 = vmatpush1.msra.mxu0 0.0
  %1465 = vmatprep.subr.mxu0 0.0
  %1466 = vmatpush1.msra.mxu0 0.0
  %1467 = vmatprep.subr.mxu0 0.0
  %1468 = vmatpush1.msra.mxu0 0.0
  %1469 = vmatprep.subr.mxu0 0.0
  %1470 = vmatpush1.msra.mxu0 0.0
  %1471 = vmatprep.subr.mxu0 0.0
  %1472 = vmatpush1.msra.mxu0 0.0
  %1473 = vmatprep.subr.mxu0 0.0
  %1474 = vmatpush1.msra.mxu0 0.0
  %1475 = vmatprep.subr.mxu0 0.0
  %1476 = vmatpush1.msra.mxu0 0.0
  %1477 = vmatprep.subr.mxu0 0.0
  %1478 = vmatpush1.msra.mxu0 0.0
  %1479 = vmatprep.mubr.f32.mxu0 0.0
  %1480 = vmatmul.mubr.f32.gmra.mrb[0].mxu0 %v1404
  %v1481 = vpop.f32.mrb[0].mxu0
  %v1482 = vadd.f32 0.0, %v1481
  %v1483 = vpop.f32.mrb[0].mxu0
  %1484 = vmatprep.mubr.f32.mxu0 0.0
  %1485 = vmatmul.mubr.f32.gmra.mrb[0].mxu0 %v1407
  %v1486 = vpop.f32.mrb[0].mxu0
  %v1487 = vadd.f32 0.0, %v1486
  %v1488 = vpop.f32.mrb[0].mxu0
  %1489 = vmatprep.mubr.f32.mxu0 0.0
  %1490 = vmatmul.mubr.f32.gmra.mrb[0].mxu0 %v1410
  %v1491 = vpop.f32.mrb[0].mxu0
  %v1492 = vadd.f32 0.0, %v1491
  %v1493 = vpop.f32.mrb[0].mxu0
  %1494 = vmatprep.mubr.f32.mxu0 0.0
  %1495 = vmatmul.mubr.f32.gmra.mrb[0].mxu0 %v1413
  %v1496 = vpop.f32.mrb[0].mxu0
  %v1497 = vadd.f32 0.0, %v1496
  %v1498 = vpop.f32.mrb[0].mxu0
  %1499 = vdwg.mxu0
  %v1500 = vmul.f32 %v1482, %v217
  %v1501 = vmul.f32 %v1487, %v218
  %v1502 = vmul.f32 %v1492, %v219
  %v1503 = vmul.f32 %v1497, %v220
  %v1504 = vpack.c.bf16 %v1175, %v1175
  %v1505 = vpack.c.bf16 %v1501, %v1500
  %v1506 = vpack.c.bf16 %v1503, %v1502
  %v1508 = vsel %vm223, %v1504, 0
  %1510 = vmatprep.subr.bf16.mxu0 0
  %1511 = vmatpush1.bf16.msra.mxu0 %v1505
  %1512 = vmatprep.subr.bf16.mxu0 0
  %1513 = vmatpush1.bf16.msra.mxu0 %v1506
  %1514 = vmatprep.subr.bf16.mxu0 0
  %1515 = vmatpush1.bf16.msra.mxu0 0
  %1516 = vmatprep.subr.bf16.mxu0 0
  %1517 = vmatpush1.bf16.msra.mxu0 0
  %1518 = vmatprep.subr.bf16.mxu0 0
  %1519 = vmatpush1.bf16.msra.mxu0 0
  %1520 = vmatprep.subr.bf16.mxu0 0
  %1521 = vmatpush1.bf16.msra.mxu0 0
  %1522 = vmatprep.subr.bf16.mxu0 0
  %1523 = vmatpush1.bf16.msra.mxu0 0
  %1524 = vmatprep.subr.bf16.mxu0 0
  %1525 = vmatpush1.bf16.msra.mxu0 0
  %1526 = vmatprep.subr.bf16.mxu0 0
  %1527 = vmatpush1.bf16.msra.mxu0 0
  %1528 = vmatprep.subr.bf16.mxu0 0
  %1529 = vmatpush1.bf16.msra.mxu0 0
  %1530 = vmatprep.subr.bf16.mxu0 0
  %1531 = vmatpush1.bf16.msra.mxu0 0
  %1532 = vmatprep.subr.bf16.mxu0 0
  %1533 = vmatpush1.bf16.msra.mxu0 0
  %1534 = vmatprep.subr.bf16.mxu0 0
  %1535 = vmatpush1.bf16.msra.mxu0 0
  %1536 = vmatprep.subr.bf16.mxu0 0
  %1537 = vmatpush1.bf16.msra.mxu0 0
  %1538 = vmatprep.subr.bf16.mxu0 0
  %1539 = vmatpush1.bf16.msra.mxu0 0
  %1540 = vmatprep.subr.bf16.mxu0 0
  %1541 = vmatpush1.bf16.msra.mxu0 0
  %1542 = vmatprep.mubr.bf16.mxu0 0
  %1543 = vmatmul.mubr.bf16.gmra.mrb[0].mxu0 %v1508
  %v1544 = vpop.f32.mrb[0].mxu0
  %v1545 = vadd.f32 0.0, %v1544
  %v1546 = vpop.f32.mrb[0].mxu0
  %v1547 = vpop.f32.mrb[0].mxu0
  %v1548 = vpop.f32.mrb[0].mxu0
  %1549 = vdwg.mxu0
  %s1550 = scalar_lea.vmem %s8, 16
  %v1551 = vld [vmem:[%s1550] sm:$0xf]
  %v1552 = vld [vmem:[%s1550 + $0x4] sm:$0xf]
  %v1553 = vld [vmem:[%s1550 + $0x8] sm:$0xf]
  %v1554 = vld [vmem:[%s1550 + $0xc] sm:$0xf]
  %v1555 = vpack.c.bf16 %v1545, %v1359
  %v1560 = vunpack.c.l.b16 %v1551
  %v1561 = vunpack.c.l.b16 %v1552
  %v1562 = vunpack.c.l.b16 %v1553
  %v1563 = vunpack.c.l.b16 %v1554
  %v1564 = vpack.c.b16 %v1561, %v1560
  %v1565 = vpack.c.b16 %v1563, %v1562
  %v1569 = vsel %vm223, %v1555, 0
  %1571 = vmatprep.subr.bf16.mxu0 0
  %1572 = vmatpush1.bf16.msra.mxu0 %v1564
  %1573 = vmatprep.subr.bf16.mxu0 0
  %1574 = vmatpush1.bf16.msra.mxu0 %v1565
  %1575 = vmatprep.subr.bf16.mxu0 0
  %1576 = vmatpush1.bf16.msra.mxu0 0
  %1577 = vmatprep.subr.bf16.mxu0 0
  %1578 = vmatpush1.bf16.msra.mxu0 0
  %1579 = vmatprep.subr.bf16.mxu0 0
  %1580 = vmatpush1.bf16.msra.mxu0 0
  %1581 = vmatprep.subr.bf16.mxu0 0
  %1582 = vmatpush1.bf16.msra.mxu0 0
  %1583 = vmatprep.subr.bf16.mxu0 0
  %1584 = vmatpush1.bf16.msra.mxu0 0
  %1585 = vmatprep.subr.bf16.mxu0 0
  %1586 = vmatpush1.bf16.msra.mxu0 0
  %1587 = vmatprep.subr.bf16.mxu0 0
  %1588 = vmatpush1.bf16.msra.mxu0 0
  %1589 = vmatprep.subr.bf16.mxu0 0
  %1590 = vmatpush1.bf16.msra.mxu0 0
  %1591 = vmatprep.subr.bf16.mxu0 0
  %1592 = vmatpush1.bf16.msra.mxu0 0
  %1593 = vmatprep.subr.bf16.mxu0 0
  %1594 = vmatpush1.bf16.msra.mxu0 0
  %1595 = vmatprep.subr.bf16.mxu0 0
  %1596 = vmatpush1.bf16.msra.mxu0 0
  %1597 = vmatprep.subr.bf16.mxu0 0
  %1598 = vmatpush1.bf16.msra.mxu0 0
  %1599 = vmatprep.subr.bf16.mxu0 0
  %1600 = vmatpush1.bf16.msra.mxu0 0
  %1601 = vmatprep.subr.bf16.mxu0 0
  %1602 = vmatpush1.bf16.msra.mxu0 0
  %1603 = vmatprep.mubr.bf16.mxu0 0
  %1604 = vmatmul.mubr.bf16.gmra.mrb[0].mxu0 %v1569
  %v1605 = vpop.f32.mrb[0].mxu0
  %v1606 = vadd.f32 0.0, %v1605
  %v1607 = vpop.f32.mrb[0].mxu0
  %v1608 = vpop.f32.mrb[0].mxu0
  %v1609 = vadd.f32 0.0, %v1608
  %v1610 = vpop.f32.mrb[0].mxu0
  %1611 = vdwg.mxu0
  %v1612 = vadd.f32 %v1066, %v1606
  %v1613 = vadd.f32 %v1067, %v1609
  %s1614 = scalar_lea.vmem %s9, 1
  %v1615 = vld [vmem:[%s1614] sm:$0x1]
  %v1617 = vlaneseq
  %v1618 = vshrl.u32 %v1617, 7
  %v1619 = vsub.s32 0, %v1618
  %v1620 = vrot.slane %v1615, %v1619
  %v1622 = vadd.f32 %v1612, %v1620
  %v1623 = vadd.f32 %v1613, %v1620
  %s1624 = scalar_lea.vmem %s10, 1
  %v1625 = vld [vmem:[%s1624] sm:$0x1]
  %s1626 = scalar_lea.vmem %s11, 1
  %v1627 = vld [vmem:[%s1626] sm:$0x1]
  %v1628 = vsel %vm223, %v1622, 0.0
  %1629 = vadd.xlane.f32.xlu0 %v1628
  %v1630 = vpop.xlane.xlu0 %1629
  %v1631 = vsel %vm223, %v1623, 0.0
  %1632 = vadd.xlane.f32.xlu0 %v1631
  %v1633 = vpop.xlane.xlu0 %1632
  %v1634 = vmul.f32 %v1630, %v230
  %v1635 = vmul.f32 %v1633, %v230
  %v1636 = vsub.f32 %v1622, %v1634
  %v1637 = vsub.f32 %v1623, %v1635
  %v1638 = vmul.f32 %v1636, %v1636
  %v1639 = vmul.f32 %v1637, %v1637
  %v1640 = vsel %vm223, %v1638, 0.0
  %1641 = vadd.xlane.f32.xlu0 %v1640
  %v1642 = vpop.xlane.xlu0 %1641
  %v1643 = vsel %vm223, %v1639, 0.0
  %1644 = vadd.xlane.f32.xlu0 %v1643
  %v1645 = vpop.xlane.xlu0 %1644
  %v1646 = vmul.f32 %v1642, %v230
  %v1647 = vmul.f32 %v1645, %v230
  %v1648 = vadd.f32 %v1646, 1e-05
  %v1649 = vadd.f32 %v1647, 1e-05
  %v1650 = vrsqrt.pop %v1648
  %v1651 = vrsqrt.pop %v1649
  %v1652 = vmul.f32 %v1636, %v1650
  %v1653 = vmul.f32 %v1637, %v1651
  %v1655 = vlaneseq
  %v1656 = vshrl.u32 %v1655, 7
  %v1657 = vsub.s32 0, %v1656
  %v1658 = vrot.slane %v1625, %v1657
  %v1660 = vmul.f32 %v1652, %v1658
  %v1661 = vmul.f32 %v1653, %v1658
  %v1663 = vlaneseq
  %v1664 = vshrl.u32 %v1663, 7
  %v1665 = vsub.s32 0, %v1664
  %v1666 = vrot.slane %v1627, %v1665
  %v1668 = vadd.f32 %v1660, %v1666
  %v1669 = vadd.f32 %v1661, %v1666
  %s1670 = scalar_lea.vmem %s12, 16
  %v1671 = vld [vmem:[%s1670] sm:$0xf]
  %v1672 = vld [vmem:[%s1670 + $0x4] sm:$0xf]
  %v1673 = vld [vmem:[%s1670 + $0x8] sm:$0xf]
  %v1674 = vld [vmem:[%s1670 + $0xc] sm:$0xf]
  %v1675 = vpack.c.bf16 %v1669, %v1668
  %s1676 = scalar_lea.vmem %s13, 1
  %v1677 = vld [vmem:[%s1676] sm:$0x1]
  %v1679 = vlaneseq
  %v1680 = vshrl.u32 %v1679, 7
  %v1681 = vsub.s32 0, %v1680
  %v1682 = vrot.slane %v1677, %v1681
  %v1688 = vunpack.c.l.b16 %v1671
  %v1689 = vunpack.c.l.b16 %v1672
  %v1690 = vunpack.c.l.b16 %v1673
  %v1691 = vunpack.c.l.b16 %v1674
  %v1692 = vpack.c.b16 %v1689, %v1688
  %v1693 = vpack.c.b16 %v1691, %v1690
  %v1697 = vsel %vm223, %v1675, 0
  %1699 = vmatprep.subr.bf16.mxu0 0
  %1700 = vmatpush1.bf16.msra.mxu0 %v1692
  %1701 = vmatprep.subr.bf16.mxu0 0
  %1702 = vmatpush1.bf16.msra.mxu0 %v1693
  %1703 = vmatprep.subr.bf16.mxu0 0
  %1704 = vmatpush1.bf16.msra.mxu0 0
  %1705 = vmatprep.subr.bf16.mxu0 0
  %1706 = vmatpush1.bf16.msra.mxu0 0
  %1707 = vmatprep.subr.bf16.mxu0 0
  %1708 = vmatpush1.bf16.msra.mxu0 0
  %1709 = vmatprep.subr.bf16.mxu0 0
  %1710 = vmatpush1.bf16.msra.mxu0 0
  %1711 = vmatprep.subr.bf16.mxu0 0
  %1712 = vmatpush1.bf16.msra.mxu0 0
  %1713 = vmatprep.subr.bf16.mxu0 0
  %1714 = vmatpush1.bf16.msra.mxu0 0
  %1715 = vmatprep.subr.bf16.mxu0 0
  %1716 = vmatpush1.bf16.msra.mxu0 0
  %1717 = vmatprep.subr.bf16.mxu0 0
  %1718 = vmatpush1.bf16.msra.mxu0 0
  %1719 = vmatprep.subr.bf16.mxu0 0
  %1720 = vmatpush1.bf16.msra.mxu0 0
  %1721 = vmatprep.subr.bf16.mxu0 0
  %1722 = vmatpush1.bf16.msra.mxu0 0
  %1723 = vmatprep.subr.bf16.mxu0 0
  %1724 = vmatpush1.bf16.msra.mxu0 0
  %1725 = vmatprep.subr.bf16.mxu0 0
  %1726 = vmatpush1.bf16.msra.mxu0 0
  %1727 = vmatprep.subr.bf16.mxu0 0
  %1728 = vmatpush1.bf16.msra.mxu0 0
  %1729 = vmatprep.subr.bf16.mxu0 0
  %1730 = vmatpush1.bf16.msra.mxu0 0
  %1731 = vmatprep.mubr.bf16.mxu0 0
  %1732 = vmatmul.mubr.bf16.gmra.mrb[0].mxu0 %v1697
  %v1733 = vpop.f32.mrb[0].mxu0
  %v1734 = vadd.f32 %v1682, %v1733
  %v1735 = vpop.f32.mrb[0].mxu0
  %v1736 = vpop.f32.mrb[0].mxu0
  %v1737 = vadd.f32 %v1682, %v1736
  %v1738 = vpop.f32.mrb[0].mxu0
  %1739 = vdwg.mxu0
  %v1740 = vmul.f32 %v1734, 0.5
  %v1741 = vmul.f32 %v1737, 0.5
  %v1742 = vmul.f32 %v1734, 0.70710677
  %v1743 = vmul.f32 %v1737, 0.70710677
  %vm1744 = vcmp.ge.f32.partialorder %v1742, 0.0
  %vm1745 = vcmp.ge.f32.partialorder %v1743, 0.0
  %v1746 = vsel %vm1744, 1.0, -1.0
  %v1747 = vsel %vm1745, 1.0, -1.0
  %v1748 = vand.u32 2147483647, %v1742
  %v1749 = vand.u32 2147483647, %v1743
  %v1750 = vmul.f32 %v1748, 0.3275911
  %v1751 = vmul.f32 %v1749, 0.3275911
  %v1752 = vadd.f32 %v1750, 1.0
  %v1753 = vadd.f32 %v1751, 1.0
  %v1754 = vrcp.pop %v1752
  %v1755 = vmul.f32 1.0, %v1754
  %v1756 = vrcp.pop %v1753
  %v1757 = vmul.f32 1.0, %v1756
  %v1758 = vmul.f32 %v1755, 1.0614054
  %v1759 = vmul.f32 %v1757, 1.0614054
  %v1760 = vadd.f32 %v1758, -1.4531521
  %v1761 = vadd.f32 %v1759, -1.4531521
  %v1762 = vmul.f32 %v1760, %v1755
  %v1763 = vmul.f32 %v1761, %v1757
  %v1764 = vadd.f32 %v1762, 1.4214138
  %v1765 = vadd.f32 %v1763, 1.4214138
  %v1766 = vmul.f32 %v1764, %v1755
  %v1767 = vmul.f32 %v1765, %v1757
  %v1768 = vadd.f32 %v1766, -0.28449672
  %v1769 = vadd.f32 %v1767, -0.28449672
  %v1770 = vmul.f32 %v1768, %v1755
  %v1771 = vmul.f32 %v1769, %v1757
  %v1772 = vadd.f32 %v1770, 0.2548296
  %v1773 = vadd.f32 %v1771, 0.2548296
  %v1774 = vmul.f32 %v1772, %v1755
  %v1775 = vmul.f32 %v1773, %v1757
  %v1776 = vsub.f32 0.0, %v1748
  %v1777 = vsub.f32 0.0, %v1749
  %v1778 = vmul.f32 %v1776, %v1748
  %v1779 = vmul.f32 %v1777, %v1749
  %v1780 = vmul.f32 %v1778, 1.442695
  %v1781 = vpow.pop %v1780
  %v1782 = vmul.f32 %v1779, 1.442695
  %v1783 = vpow.pop %v1782
  %v1784 = vmul.f32 %v1774, %v1781
  %v1785 = vmul.f32 %v1775, %v1783
  %v1786 = vsub.f32 1.0, %v1784
  %v1787 = vsub.f32 1.0, %v1785
  %v1788 = vmul.f32 %v1746, %v1786
  %v1789 = vmul.f32 %v1747, %v1787
  %v1790 = vadd.f32 %v1788, 1.0
  %v1791 = vadd.f32 %v1789, 1.0
  %v1792 = vmul.f32 %v1740, %v1790
  %v1793 = vmul.f32 %v1741, %v1791
  %s1794 = scalar_lea.vmem %s14, 64
  %v1795 = vld [vmem:[%s1794] sm:$0xf]
  %v1796 = vld [vmem:[%s1794 + $0x4] sm:$0xf]
  %v1797 = vld [vmem:[%s1794 + $0x8] sm:$0xf]
  %v1798 = vld [vmem:[%s1794 + $0xc] sm:$0xf]
  %v1799 = vld [vmem:[%s1794 + $0x10] sm:$0xf]
  %v1800 = vld [vmem:[%s1794 + $0x14] sm:$0xf]
  %v1801 = vld [vmem:[%s1794 + $0x18] sm:$0xf]
  %v1802 = vld [vmem:[%s1794 + $0x1c] sm:$0xf]
  %v1803 = vld [vmem:[%s1794 + $0x20] sm:$0xf]
  %v1804 = vld [vmem:[%s1794 + $0x24] sm:$0xf]
  %v1805 = vld [vmem:[%s1794 + $0x28] sm:$0xf]
  %v1806 = vld [vmem:[%s1794 + $0x2c] sm:$0xf]
  %v1807 = vld [vmem:[%s1794 + $0x30] sm:$0xf]
  %v1808 = vld [vmem:[%s1794 + $0x34] sm:$0xf]
  %v1809 = vld [vmem:[%s1794 + $0x38] sm:$0xf]
  %v1810 = vld [vmem:[%s1794 + $0x3c] sm:$0xf]
  %v1811 = vpack.c.bf16 %v1793, %v1792
  %v1828 = vunpack.c.l.b16 %v1795
  %v1829 = vunpack.c.l.b16 %v1796
  %v1830 = vunpack.c.l.b16 %v1797
  %v1831 = vunpack.c.l.b16 %v1798
  %v1832 = vunpack.c.l.b16 %v1799
  %v1833 = vunpack.c.l.b16 %v1800
  %v1834 = vunpack.c.l.b16 %v1801
  %v1835 = vunpack.c.l.b16 %v1802
  %v1836 = vunpack.c.l.b16 %v1803
  %v1837 = vunpack.c.l.b16 %v1804
  %v1838 = vunpack.c.l.b16 %v1805
  %v1839 = vunpack.c.l.b16 %v1806
  %v1840 = vunpack.c.l.b16 %v1807
  %v1841 = vunpack.c.l.b16 %v1808
  %v1842 = vunpack.c.l.b16 %v1809
  %v1843 = vunpack.c.l.b16 %v1810
  %v1844 = vpack.c.b16 %v1829, %v1828
  %v1845 = vpack.c.b16 %v1831, %v1830
  %v1846 = vpack.c.b16 %v1833, %v1832
  %v1847 = vpack.c.b16 %v1835, %v1834
  %v1848 = vpack.c.b16 %v1837, %v1836
  %v1849 = vpack.c.b16 %v1839, %v1838
  %v1850 = vpack.c.b16 %v1841, %v1840
  %v1851 = vpack.c.b16 %v1843, %v1842
  %1860 = vmatprep.subr.bf16.mxu0 0
  %1861 = vmatpush1.bf16.msra.mxu0 %v1844
  %1862 = vmatprep.subr.bf16.mxu0 0
  %1863 = vmatpush1.bf16.msra.mxu0 %v1845
  %1864 = vmatprep.subr.bf16.mxu0 0
  %1865 = vmatpush1.bf16.msra.mxu0 %v1846
  %1866 = vmatprep.subr.bf16.mxu0 0
  %1867 = vmatpush1.bf16.msra.mxu0 %v1847
  %1868 = vmatprep.subr.bf16.mxu0 0
  %1869 = vmatpush1.bf16.msra.mxu0 %v1848
  %1870 = vmatprep.subr.bf16.mxu0 0
  %1871 = vmatpush1.bf16.msra.mxu0 %v1849
  %1872 = vmatprep.subr.bf16.mxu0 0
  %1873 = vmatpush1.bf16.msra.mxu0 %v1850
  %1874 = vmatprep.subr.bf16.mxu0 0
  %1875 = vmatpush1.bf16.msra.mxu0 %v1851
  %1876 = vmatprep.subr.bf16.mxu0 0
  %1877 = vmatpush1.bf16.msra.mxu0 0
  %1878 = vmatprep.subr.bf16.mxu0 0
  %1879 = vmatpush1.bf16.msra.mxu0 0
  %1880 = vmatprep.subr.bf16.mxu0 0
  %1881 = vmatpush1.bf16.msra.mxu0 0
  %1882 = vmatprep.subr.bf16.mxu0 0
  %1883 = vmatpush1.bf16.msra.mxu0 0
  %1884 = vmatprep.subr.bf16.mxu0 0
  %1885 = vmatpush1.bf16.msra.mxu0 0
  %1886 = vmatprep.subr.bf16.mxu0 0
  %1887 = vmatpush1.bf16.msra.mxu0 0
  %1888 = vmatprep.subr.bf16.mxu0 0
  %1889 = vmatpush1.bf16.msra.mxu0 0
  %1890 = vmatprep.subr.bf16.mxu0 0
  %1891 = vmatpush1.bf16.msra.mxu0 0
  %1892 = vmatprep.mubr.bf16.mxu0 0
  %1893 = vmatmul.mubr.bf16.gmra.mrb[0].mxu0 %v1811
  %v1894 = vpop.f32.mrb[0].mxu0
  %v1895 = vadd.f32 0.0, %v1894
  %v1896 = vpop.f32.mrb[0].mxu0
  %v1897 = vpop.f32.mrb[0].mxu0
  %v1898 = vadd.f32 0.0, %v1897
  %v1899 = vpop.f32.mrb[0].mxu0
  %1900 = vdwg.mxu0
  %v1901 = vadd.f32 %v1622, %v1895
  %v1902 = vadd.f32 %v1623, %v1898
  %s1903 = scalar_lea.vmem %s15, 1
  %v1904 = vld [vmem:[%s1903] sm:$0x1]
  %v1906 = vlaneseq
  %v1907 = vshrl.u32 %v1906, 7
  %v1908 = vsub.s32 0, %v1907
  %v1909 = vrot.slane %v1904, %v1908
  %v1911 = vadd.f32 %v1901, %v1909
  %v1912 = vadd.f32 %v1902, %v1909
  %v1913 = vld [vmem:[%s16] sm:$0x1]
  %v1914 = vld [vmem:[%s17] sm:$0x1]
  %v1915 = vsel %vm223, %v1911, 0.0
  %1916 = vadd.xlane.f32.xlu0 %v1915
  %v1917 = vpop.xlane.xlu0 %1916
  %v1918 = vsel %vm223, %v1912, 0.0
  %1919 = vadd.xlane.f32.xlu0 %v1918
  %v1920 = vpop.xlane.xlu0 %1919
  %v1921 = vmul.f32 %v1917, %v230
  %v1922 = vmul.f32 %v1920, %v230
  %v1923 = vsub.f32 %v1911, %v1921
  %v1924 = vsub.f32 %v1912, %v1922
  %v1925 = vmul.f32 %v1923, %v1923
  %v1926 = vmul.f32 %v1924, %v1924
  %v1927 = vsel %vm223, %v1925, 0.0
  %1928 = vadd.xlane.f32.xlu0 %v1927
  %v1929 = vpop.xlane.xlu0 %1928
  %v1930 = vsel %vm223, %v1926, 0.0
  %1931 = vadd.xlane.f32.xlu0 %v1930
  %v1932 = vpop.xlane.xlu0 %1931
  %v1933 = vmul.f32 %v1929, %v230
  %v1934 = vmul.f32 %v1932, %v230
  %v1935 = vadd.f32 %v1933, 1e-05
  %v1936 = vadd.f32 %v1934, 1e-05
  %v1937 = vrsqrt.pop %v1935
  %v1938 = vrsqrt.pop %v1936
  %v1939 = vmul.f32 %v1923, %v1937
  %v1940 = vmul.f32 %v1924, %v1938
  %v1942 = vlaneseq
  %v1943 = vshrl.u32 %v1942, 7
  %v1944 = vsub.s32 0, %v1943
  %v1945 = vrot.slane %v1913, %v1944
  %v1947 = vmul.f32 %v1939, %v1945
  %v1948 = vmul.f32 %v1940, %v1945
  %v1950 = vlaneseq
  %v1951 = vshrl.u32 %v1950, 7
  %v1952 = vsub.s32 0, %v1951
  %v1953 = vrot.slane %v1914, %v1952
  %v1955 = vadd.f32 %v1947, %v1953
  %v1956 = vadd.f32 %v1948, %v1953
  %v1957 = vld [vmem:[%s18] sm:$0xf]
  %v1958 = vld [vmem:[%s18 + $0x4] sm:$0xf]
  %v1959 = vld [vmem:[%s18 + $0x8] sm:$0xf]
  %v1960 = vld [vmem:[%s18 + $0xc] sm:$0xf]
  %v1961 = vpack.c.bf16 %v1956, %v1955
  %v1962 = vld [vmem:[%s19] sm:$0x1]
  %v1964 = vlaneseq
  %v1965 = vshrl.u32 %v1964, 7
  %v1966 = vsub.s32 0, %v1965
  %v1967 = vrot.slane %v1962, %v1966
  %v1973 = vunpack.c.l.b16 %v1957
  %v1974 = vunpack.c.l.b16 %v1958
  %v1975 = vunpack.c.l.b16 %v1959
  %v1976 = vunpack.c.l.b16 %v1960
  %v1977 = vpack.c.b16 %v1974, %v1973
  %v1978 = vpack.c.b16 %v1976, %v1975
  %v1982 = vsel %vm223, %v1961, 0
  %1984 = vmatprep.subr.bf16.mxu0 0
  %1985 = vmatpush1.bf16.msra.mxu0 %v1977
  %1986 = vmatprep.subr.bf16.mxu0 0
  %1987 = vmatpush1.bf16.msra.mxu0 %v1978
  %1988 = vmatprep.subr.bf16.mxu0 0
  %1989 = vmatpush1.bf16.msra.mxu0 0
  %1990 = vmatprep.subr.bf16.mxu0 0
  %1991 = vmatpush1.bf16.msra.mxu0 0
  %1992 = vmatprep.subr.bf16.mxu0 0
  %1993 = vmatpush1.bf16.msra.mxu0 0
  %1994 = vmatprep.subr.bf16.mxu0 0
  %1995 = vmatpush1.bf16.msra.mxu0 0
  %1996 = vmatprep.subr.bf16.mxu0 0
  %1997 = vmatpush1.bf16.msra.mxu0 0
  %1998 = vmatprep.subr.bf16.mxu0 0
  %1999 = vmatpush1.bf16.msra.mxu0 0
  %2000 = vmatprep.subr.bf16.mxu0 0
  %2001 = vmatpush1.bf16.msra.mxu0 0
  %2002 = vmatprep.subr.bf16.mxu0 0
  %2003 = vmatpush1.bf16.msra.mxu0 0
  %2004 = vmatprep.subr.bf16.mxu0 0
  %2005 = vmatpush1.bf16.msra.mxu0 0
  %2006 = vmatprep.subr.bf16.mxu0 0
  %2007 = vmatpush1.bf16.msra.mxu0 0
  %2008 = vmatprep.subr.bf16.mxu0 0
  %2009 = vmatpush1.bf16.msra.mxu0 0
  %2010 = vmatprep.subr.bf16.mxu0 0
  %2011 = vmatpush1.bf16.msra.mxu0 0
  %2012 = vmatprep.subr.bf16.mxu0 0
  %2013 = vmatpush1.bf16.msra.mxu0 0
  %2014 = vmatprep.subr.bf16.mxu0 0
  %2015 = vmatpush1.bf16.msra.mxu0 0
  %2016 = vmatprep.mubr.bf16.mxu0 0
  %2017 = vmatmul.mubr.bf16.gmra.mrb[0].mxu0 %v1982
  %v2018 = vpop.f32.mrb[0].mxu0
  %v2019 = vadd.f32 %v1967, %v2018
  %v2020 = vpop.f32.mrb[0].mxu0
  %v2021 = vpop.f32.mrb[0].mxu0
  %v2022 = vadd.f32 %v1967, %v2021
  %v2023 = vpop.f32.mrb[0].mxu0
  %2024 = vdwg.mxu0
  %2025 = vst [vmem:[%s20] sm:$0xff] %v2019
  %2026 = vst [vmem:[%s20 + $0x8] sm:$0xff] %v2022
  // Predicated region
  $region82: #{vit_forward.1} parent=0 // pred_check
    _
  $region83: #{vit_forward.1} parent=0 // pred_check_branch
    %2028 = sbr.rel (0) target = $region85
  $region84: #{vit_forward.1} parent=0 // pred_region
    _
  $region85: #{vit_forward.1} parent=0 // pred_fallthru
    _
  // Predicated region
  $region86: #{vit_forward.1} parent=0 // pred_check
    _
  $region87: #{vit_forward.1} parent=0 // pred_check_branch
    %2030 = sbr.rel (0) target = $region89
  $region88: #{vit_forward.1} parent=0 // pred_region
    _
  $region89: #{vit_forward.1} parent=0 // pred_fallthru
    _

</llo_original>
